<compile_context>
chip_gen: v7x
topology: tpu7x:2x2x1
jax: 0.10.0
libtpu: 0.0.40
codegen_flags: <defaults>
</compile_context>

<pallas_src>
import jax
import jax.numpy as jnp
from jax import lax
from jax.experimental import pallas as pl
from jax.experimental.pallas import tpu as pltpu

# ---- problem dimensions (toy sizes consistent with the module) --------------------------
L, C_S, C_Z = 8, 32, 16        # residues, single channels, pair channels
H, D_H = 4, 8                  # heads, head dim (H * D_H == C_S)
HD = H * D_H                   # 32
QKVG_W = 4 * HD                # 128 : fused q|k|v|gate projection width (one vreg row)
TRANS_N = 4
C_T = TRANS_N * C_S            # 128 : transition hidden width
LZ = L * C_Z                   # 128 : flattened (key, channel) width of one pair row
EPS = 1e-5                     # LayerNorm eps (PyTorch default)

# ---- packed small-parameter rows (live inside the w32 slab, see below) -------------------
VEC_W = 128
(R_LN1_G, R_LN1_B, R_LNZ_G, R_LNZ_B, R_BQKVG1, R_BO1,
 R_LN2_G, R_LN2_B, R_BQKVG2, R_BO2,
 R_LN3_G, R_LN3_B, R_B1, R_B2) = range(14)
N_VEC = 14

# ---- packed weight slabs -----------------------------------------------------------------
# w32  : [32, 576]  = qkvg1 | qkvg2 | w1 | vec-rows | wo1 | wo2   (all with 32 input rows)
#        the vec-row block sits at a 128-aligned lane offset so 128-wide rows load aligned.
# w128 : [128, 192] = pair-LN averaging mat | pair-bias mat | w2  (all with 128 input rows)
W32_QKVG1, W32_QKVG2, W32_W1, W32_VECS, W32_WO1, W32_WO2, W32_TOTAL = (
    0, 128, 256, 384, 512, 544, 576)
W128_AVG, W128_WBIAS, W128_W2, W128_TOTAL = 0, 128, 160, 192


def _layernorm(x, g, b):
    mu = jnp.mean(x, axis=-1, keepdims=True)
    xc = x - mu
    var = jnp.mean(xc * xc, axis=-1, keepdims=True)
    return xc * lax.rsqrt(var + EPS) * g + b


def _gated_mha(s_ln, w_qkvg, b_qkvg, wo, bo, bias_all):
    """Gated multi-head self-attention on [L, C_S].

    One fused [L,C_S] x [C_S,4*HD] projection; q/k/v/gate are contiguous lane slices.
    1/sqrt(D_H) is pre-folded into the Q weights.  bias_all is [L, H*L] (per-head bias
    in lane blocks of L) or None.  Per-head contexts are lane-concatenated and pushed
    through a single gated [HD, C_S] output matmul.  All operands stay 2-D.
    """
    qkvg = jnp.dot(s_ln, w_qkvg, preferred_element_type=jnp.float32) + b_qkvg   # [L, 128]
    gate = jax.nn.sigmoid(qkvg[:, 3 * HD:4 * HD])                               # [L, HD]
    ctx = []
    for h in range(H):                                    # static unroll (H = 4), tiny tiles
        qh = qkvg[:, 0 * HD + h * D_H:0 * HD + (h + 1) * D_H]
        kh = qkvg[:, 1 * HD + h * D_H:1 * HD + (h + 1) * D_H]
        vh = qkvg[:, 2 * HD + h * D_H:2 * HD + (h + 1) * D_H]
        logits = lax.dot_general(qh, kh, (((1,), (1,)), ((), ())),
                                 preferred_element_type=jnp.float32)            # q @ k.T
        if bias_all is not None:
            logits = logits + bias_all[:, h * L:(h + 1) * L]
        logits = logits - jnp.max(logits, axis=-1, keepdims=True)
        p = jnp.exp(logits)
        p = p * pl.reciprocal(jnp.sum(p, axis=-1, keepdims=True), approx=True)  # EUP recip
        ctx.append(jnp.dot(p, vh, preferred_element_type=jnp.float32))          # [L, D_H]
    o_all = jnp.concatenate(ctx, axis=-1) * gate                                # [L, HD]
    return jnp.dot(o_all, wo, preferred_element_type=jnp.float32) + bo          # [L, C_S]


def single_block_kernel(seq_ref, pair_ref, w32_ref, w128_ref, out_ref):
    s = seq_ref[...].astype(jnp.float32)     # [L, C_S]
    z = pair_ref[...].astype(jnp.float32)    # [L, L*C_Z]  lane-dense pair rows

    def vrow(r, width):                      # one packed small-parameter row -> [1, width]
        return w32_ref[r:r + 1, W32_VECS:W32_VECS + width]

    ln1_g, ln1_b = vrow(R_LN1_G, C_S), vrow(R_LN1_B, C_S)
    lnz_g, lnz_b = vrow(R_LNZ_G, LZ), vrow(R_LNZ_B, LZ)          # tiled per key group
    b_qkvg1, bo1 = vrow(R_BQKVG1, QKVG_W), vrow(R_BO1, C_S)
    ln2_g, ln2_b = vrow(R_LN2_G, C_S), vrow(R_LN2_B, C_S)
    b_qkvg2, bo2 = vrow(R_BQKVG2, QKVG_W), vrow(R_BO2, C_S)
    ln3_g, ln3_b = vrow(R_LN3_G, C_S), vrow(R_LN3_B, C_S)
    b1, b2 = vrow(R_B1, C_T), vrow(R_B2, C_S)

    w_qkvg1 = w32_ref[:, W32_QKVG1:W32_QKVG1 + QKVG_W]
    w_qkvg2 = w32_ref[:, W32_QKVG2:W32_QKVG2 + QKVG_W]
    w1 = w32_ref[:, W32_W1:W32_W1 + C_T]
    wo1 = w32_ref[:, W32_WO1:W32_WO1 + C_S]
    wo2 = w32_ref[:, W32_WO2:W32_WO2 + C_S]
    avg_mat = w128_ref[:, W128_AVG:W128_AVG + LZ]
    w_bias = w128_ref[:, W128_WBIAS:W128_WBIAS + H * L]
    w2 = w128_ref[:, W128_W2:W128_W2 + C_S]

    # ---- pair bias for ALL heads: LayerNorm over C_Z and the per-head projection are
    #      expressed as matmuls on the lane-dense [L, L*C_Z] layout (MXU work instead of
    #      XLU reductions; no 3-D temporaries, no reshapes).
    mu = jnp.dot(z, avg_mat, preferred_element_type=jnp.float32)       # group mean, broadcast
    zc = z - mu
    var = jnp.dot(zc * zc, avg_mat, preferred_element_type=jnp.float32)
    z_ln = zc * lax.rsqrt(var + EPS) * lnz_g + lnz_b
    bias_all = jnp.dot(z_ln, w_bias, preferred_element_type=jnp.float32)   # [L, H*L]

    # ---- S_Att_Pair_Bias  (dropout = eval-mode identity)
    s = s + _gated_mha(_layernorm(s, ln1_g, ln1_b), w_qkvg1, b_qkvg1, wo1, bo1, bias_all)
    # ---- S_Att
    s = s + _gated_mha(_layernorm(s, ln2_g, ln2_b), w_qkvg2, b_qkvg2, wo2, bo2, None)
    # ---- S_Transition: LN -> Linear(4x) -> ReLU -> Linear
    s_ln = _layernorm(s, ln3_g, ln3_b)
    hdn = jnp.maximum(jnp.dot(s_ln, w1, preferred_element_type=jnp.float32) + b1, 0.0)
    s = s + jnp.dot(hdn, w2, preferred_element_type=jnp.float32) + b2

    out_ref[...] = s.astype(out_ref.dtype)


@jax.jit
def single_transformer_block(seq, pair, packed):
    """seq: [L, C_S], pair: [L, L, C_Z] -> updated seq [L, C_S]."""
    pair2 = pair.reshape(L, L * C_Z)        # free (contiguous); lane-dense pair rows
    args = (seq, pair2, packed["w32"], packed["w128"])
    vmem = pl.BlockSpec(memory_space=pltpu.MemorySpace.VMEM)
    # Whole problem fits in VMEM in one invocation at these sizes; no grid needed.
    # TODO(synk): for realistic L (~1k), add a grid over query tiles (mark "parallel" for
    #             v7x's 2 TensorCores) and stream the pair slab over kv tiles instead of
    #             keeping it resident (64 MiB VMEM on v7x); raise vmem_limit_bytes on v5e/v6e.
    return pl.pallas_call(
        single_block_kernel,
        out_shape=jax.ShapeDtypeStruct(seq.shape, seq.dtype),
        in_specs=[vmem] * len(args),
        out_specs=vmem,
    )(*args)


# ------------------------------- parameters ----------------------------------------------
def init_params(key):
    """Raw (PyTorch-layout-like) params; Linear weights stored transposed ([in, out])."""
    keys = iter(jax.random.split(key, 32))

    def nrm(shape, scale=0.05):
        return (scale * jax.random.normal(next(keys), shape)).astype(jnp.float32)

    return {
        "ln1_g": 1.0 + nrm((1, C_S)), "ln1_b": nrm((1, C_S)),
        "lnz_g": 1.0 + nrm((1, C_Z)), "lnz_b": nrm((1, C_Z)),
        "wq1": nrm((C_S, HD)), "wk1": nrm((C_S, HD)), "wv1": nrm((C_S, HD)),
        "wbt": nrm((H, C_Z)),
        "wg1": nrm((C_S, HD)), "bg1": nrm((1, HD)),
        "wo1": nrm((HD, C_S)), "bo1": nrm((1, C_S)),
        "ln2_g": 1.0 + nrm((1, C_S)), "ln2_b": nrm((1, C_S)),
        "wq2": nrm((C_S, HD)), "wk2": nrm((C_S, HD)), "wv2": nrm((C_S, HD)),
        "wg2": nrm((C_S, HD)), "bg2": nrm((1, HD)),
        "wo2": nrm((HD, C_S)), "bo2": nrm((1, C_S)),
        "ln3_g": 1.0 + nrm((1, C_S)), "ln3_b": nrm((1, C_S)),
        "w1": nrm((C_S, C_T)), "b1": nrm((1, C_T)),
        "w2": nrm((C_T, C_S)), "b2": nrm((1, C_S)),
    }


def pack_params(p):
    """Host-side, one-time repacking into the kernel's fused / lane-dense layout."""
    f32 = jnp.float32
    scale = 1.0 / (D_H ** 0.5)

    def row(v):
        v = jnp.asarray(v, f32).reshape(-1)
        return jnp.pad(v, (0, VEC_W - v.shape[0]))

    # fused q|k|v|gate projections; 1/sqrt(D_H) folded into the Q block
    w_qkvg1 = jnp.concatenate([p["wq1"] * scale, p["wk1"], p["wv1"], p["wg1"]], axis=1)
    w_qkvg2 = jnp.concatenate([p["wq2"] * scale, p["wk2"], p["wv2"], p["wg2"]], axis=1)
    b_qkvg1 = jnp.concatenate([jnp.zeros((3 * HD,), f32), p["bg1"].reshape(-1)])
    b_qkvg2 = jnp.concatenate([jnp.zeros((3 * HD,), f32), p["bg2"].reshape(-1)])

    # pair LayerNorm as matmuls on the [L, L*C_Z] layout:
    # block-diagonal averaging matrix (1/C_Z inside each C_Z x C_Z diagonal block)
    blk = jnp.arange(LZ) // C_Z
    avg_mat = jnp.where(blk[:, None] == blk[None, :], 1.0 / C_Z, 0.0).astype(f32)
    # per-head pair-bias projection: w_bias[j*C_Z + c, h*L + j] = wbt[h, c]
    n_idx, m_idx = jnp.arange(LZ), jnp.arange(H * L)
    w_bias = jnp.where(
        (n_idx[:, None] // C_Z) == (m_idx[None, :] % L),
        p["wbt"][m_idx[None, :] // L, n_idx[:, None] % C_Z], 0.0).astype(f32)
    # LN(z) affine params tiled across the L key groups
    lnz_g_t = jnp.tile(p["lnz_g"].reshape(-1), L)
    lnz_b_t = jnp.tile(p["lnz_b"].reshape(-1), L)

    vecs = jnp.stack([
        row(p["ln1_g"]), row(p["ln1_b"]), row(lnz_g_t), row(lnz_b_t),
        row(b_qkvg1), row(p["bo1"]),
        row(p["ln2_g"]), row(p["ln2_b"]), row(b_qkvg2), row(p["bo2"]),
        row(p["ln3_g"]), row(p["ln3_b"]), row(p["b1"]), row(p["b2"]),
    ])
    assert vecs.shape == (N_VEC, VEC_W)
    vecs = jnp.pad(vecs, ((0, C_S - N_VEC), (0, 0)))            # rows 14..31 unused

    w32 = jnp.concatenate([w_qkvg1, w_qkvg2, p["w1"], vecs, p["wo1"], p["wo2"]], axis=1)
    w128 = jnp.concatenate([avg_mat, w_bias, p["w2"]], axis=1)
    assert w32.shape == (C_S, W32_TOTAL)
    assert w128.shape == (LZ, W128_TOTAL)
    return {"w32": w32, "w128": w128}


# ------------------------------- pure-JAX reference --------------------------------------
def _reference_forward(seq, pair, p):
    def ln(x, g, b):
        mu = x.mean(-1, keepdims=True)
        var = ((x - mu) ** 2).mean(-1, keepdims=True)
        return (x - mu) / jnp.sqrt(var + EPS) * g + b

    def gated_mha(s, ln_g, ln_b, wq, wk, wv, wg, bg, wo, bo, bias_hll):
        x = ln(s, ln_g, ln_b)
        q, k, v = x @ wq, x @ wk, x @ wv
        g = jax.nn.sigmoid(x @ wg + bg)
        out = jnp.broadcast_to(bo, (L, C_S))
        for h in range(H):
            sl = slice(h * D_H, (h + 1) * D_H)
            logits = (q[:, sl] @ k[:, sl].T) / (D_H ** 0.5)
            if bias_hll is not None:
                logits = logits + bias_hll[h]
            w = jax.nn.softmax(logits, axis=-1)
            out = out + ((w @ v[:, sl]) * g[:, sl]) @ wo[sl, :]
        return out

    z_ln = ln(pair, p["lnz_g"].reshape(1, 1, C_Z), p["lnz_b"].reshape(1, 1, C_Z))
    bias = jnp.einsum("ijc,hc->hij", z_ln, p["wbt"])
    seq = seq + gated_mha(seq, p["ln1_g"], p["ln1_b"], p["wq1"], p["wk1"], p["wv1"],
                          p["wg1"], p["bg1"], p["wo1"], p["bo1"], bias)
    seq = seq + gated_mha(seq, p["ln2_g"], p["ln2_b"], p["wq2"], p["wk2"], p["wv2"],
                          p["wg2"], p["bg2"], p["wo2"], p["bo2"], None)
    x = ln(seq, p["ln3_g"], p["ln3_b"])
    return seq + jnp.maximum(x @ p["w1"] + p["b1"], 0.0) @ p["w2"] + p["b2"]


if __name__ == "__main__":
    key = jax.random.PRNGKey(0)
    k_seq, k_pair, k_params = jax.random.split(key, 3)
    seq = jax.random.normal(k_seq, (L, C_S), jnp.float32)
    pair = jax.random.normal(k_pair, (L, L, C_Z), jnp.float32)
    raw = init_params(k_params)
    packed = pack_params(raw)

    out = single_transformer_block(seq, pair, packed)
    out = jax.block_until_ready(out)

    assert out.shape == (L, C_S), out.shape
    assert bool(jnp.all(jnp.isfinite(out)))
    ref = _reference_forward(seq, pair, raw)
    assert bool(jnp.allclose(out, ref, rtol=2e-2, atol=2e-2)), \
        float(jnp.max(jnp.abs(out - ref)))
    print("KERNEL_OK")
</pallas_src>

<mosaic_0001>
module attributes {stable_mosaic.version = 11 : i64} {
  func.func @single_block_kernel(%arg0: memref<8x32xf32, #tpu.memory_space<vmem>>, %arg1: memref<8x128xf32, #tpu.memory_space<vmem>>, %arg2: memref<32x576xf32, #tpu.memory_space<vmem>>, %arg3: memref<128x192xf32, #tpu.memory_space<vmem>>, %arg4: memref<8x32xf32, #tpu.memory_space<vmem>>) attributes {dimension_semantics = [], scalar_prefetch = 0 : i64, scratch_operands = 0 : i64, tpu.core_type = #tpu.core_type<tc>} {
    %c0 = arith.constant 0 : index
    %c0_0 = arith.constant 0 : index
    %0 = vector.load %arg0[%c0, %c0_0] : memref<8x32xf32, #tpu.memory_space<vmem>>, vector<8x32xf32>
    %c0_1 = arith.constant 0 : index
    %c0_2 = arith.constant 0 : index
    %1 = vector.load %arg1[%c0_1, %c0_2] : memref<8x128xf32, #tpu.memory_space<vmem>>, vector<8x128xf32>
    %c0_3 = arith.constant 0 : index
    %c384 = arith.constant 384 : index
    %2 = vector.load %arg2[%c0_3, %c384] : memref<32x576xf32, #tpu.memory_space<vmem>>, vector<1x32xf32>
    %c1 = arith.constant 1 : index
    %c384_4 = arith.constant 384 : index
    %3 = vector.load %arg2[%c1, %c384_4] : memref<32x576xf32, #tpu.memory_space<vmem>>, vector<1x32xf32>
    %c2 = arith.constant 2 : index
    %c384_5 = arith.constant 384 : index
    %4 = vector.load %arg2[%c2, %c384_5] : memref<32x576xf32, #tpu.memory_space<vmem>>, vector<1x128xf32>
    %c3 = arith.constant 3 : index
    %c384_6 = arith.constant 384 : index
    %5 = vector.load %arg2[%c3, %c384_6] : memref<32x576xf32, #tpu.memory_space<vmem>>, vector<1x128xf32>
    %c4 = arith.constant 4 : index
    %c384_7 = arith.constant 384 : index
    %6 = vector.load %arg2[%c4, %c384_7] : memref<32x576xf32, #tpu.memory_space<vmem>>, vector<1x128xf32>
    %c5 = arith.constant 5 : index
    %c384_8 = arith.constant 384 : index
    %7 = vector.load %arg2[%c5, %c384_8] : memref<32x576xf32, #tpu.memory_space<vmem>>, vector<1x32xf32>
    %c6 = arith.constant 6 : index
    %c384_9 = arith.constant 384 : index
    %8 = vector.load %arg2[%c6, %c384_9] : memref<32x576xf32, #tpu.memory_space<vmem>>, vector<1x32xf32>
    %c7 = arith.constant 7 : index
    %c384_10 = arith.constant 384 : index
    %9 = vector.load %arg2[%c7, %c384_10] : memref<32x576xf32, #tpu.memory_space<vmem>>, vector<1x32xf32>
    %c8 = arith.constant 8 : index
    %c384_11 = arith.constant 384 : index
    %10 = vector.load %arg2[%c8, %c384_11] : memref<32x576xf32, #tpu.memory_space<vmem>>, vector<1x128xf32>
    %c9 = arith.constant 9 : index
    %c384_12 = arith.constant 384 : index
    %11 = vector.load %arg2[%c9, %c384_12] : memref<32x576xf32, #tpu.memory_space<vmem>>, vector<1x32xf32>
    %c10 = arith.constant 10 : index
    %c384_13 = arith.constant 384 : index
    %12 = vector.load %arg2[%c10, %c384_13] : memref<32x576xf32, #tpu.memory_space<vmem>>, vector<1x32xf32>
    %c11 = arith.constant 11 : index
    %c384_14 = arith.constant 384 : index
    %13 = vector.load %arg2[%c11, %c384_14] : memref<32x576xf32, #tpu.memory_space<vmem>>, vector<1x32xf32>
    %c12 = arith.constant 12 : index
    %c384_15 = arith.constant 384 : index
    %14 = vector.load %arg2[%c12, %c384_15] : memref<32x576xf32, #tpu.memory_space<vmem>>, vector<1x128xf32>
    %c13 = arith.constant 13 : index
    %c384_16 = arith.constant 384 : index
    %15 = vector.load %arg2[%c13, %c384_16] : memref<32x576xf32, #tpu.memory_space<vmem>>, vector<1x32xf32>
    %c0_17 = arith.constant 0 : index
    %c0_18 = arith.constant 0 : index
    %16 = vector.load %arg2[%c0_17, %c0_18] : memref<32x576xf32, #tpu.memory_space<vmem>>, vector<32x128xf32>
    %c0_19 = arith.constant 0 : index
    %c128 = arith.constant 128 : index
    %17 = vector.load %arg2[%c0_19, %c128] : memref<32x576xf32, #tpu.memory_space<vmem>>, vector<32x128xf32>
    %c0_20 = arith.constant 0 : index
    %c256 = arith.constant 256 : index
    %18 = vector.load %arg2[%c0_20, %c256] : memref<32x576xf32, #tpu.memory_space<vmem>>, vector<32x128xf32>
    %c0_21 = arith.constant 0 : index
    %c512 = arith.constant 512 : index
    %19 = vector.load %arg2[%c0_21, %c512] : memref<32x576xf32, #tpu.memory_space<vmem>>, vector<32x32xf32>
    %c0_22 = arith.constant 0 : index
    %c544 = arith.constant 544 : index
    %20 = vector.load %arg2[%c0_22, %c544] : memref<32x576xf32, #tpu.memory_space<vmem>>, vector<32x32xf32>
    %c0_23 = arith.constant 0 : index
    %c0_24 = arith.constant 0 : index
    %21 = vector.load %arg3[%c0_23, %c0_24] : memref<128x192xf32, #tpu.memory_space<vmem>>, vector<128x128xf32>
    %c0_25 = arith.constant 0 : index
    %c128_26 = arith.constant 128 : index
    %22 = vector.load %arg3[%c0_25, %c128_26] : memref<128x192xf32, #tpu.memory_space<vmem>>, vector<128x32xf32>
    %c0_27 = arith.constant 0 : index
    %c160 = arith.constant 160 : index
    %23 = vector.load %arg3[%c0_27, %c160] : memref<128x192xf32, #tpu.memory_space<vmem>>, vector<128x32xf32>
    %cst = arith.constant dense<0.000000e+00> : vector<8x128xf32>
    %24 = tpu.matmul %1, %21, %cst {dimension_numbers = #tpu.dot_dimension_numbers<[1], [0], [0], [1], [0, 0, 1, 1], [], []>} : vector<8x128xf32>, vector<128x128xf32>, vector<8x128xf32> -> vector<8x128xf32>
    %25 = arith.subf %1, %24 : vector<8x128xf32>
    %26 = arith.mulf %25, %25 : vector<8x128xf32>
    %cst_28 = arith.constant dense<0.000000e+00> : vector<8x128xf32>
    %27 = tpu.matmul %26, %21, %cst_28 {dimension_numbers = #tpu.dot_dimension_numbers<[1], [0], [0], [1], [0, 0, 1, 1], [], []>} : vector<8x128xf32>, vector<128x128xf32>, vector<8x128xf32> -> vector<8x128xf32>
    %cst_29 = arith.constant 9.99999974E-6 : f32
    %28 = vector.broadcast %cst_29 : f32 to vector<8x128xf32>
    %29 = arith.addf %27, %28 : vector<8x128xf32>
    %30 = math.rsqrt %29 : vector<8x128xf32>
    %31 = arith.mulf %25, %30 : vector<8x128xf32>
    %32 = vector.broadcast %4 : vector<1x128xf32> to vector<8x128xf32>
    %33 = arith.mulf %31, %32 : vector<8x128xf32>
    %34 = vector.broadcast %5 : vector<1x128xf32> to vector<8x128xf32>
    %35 = arith.addf %33, %34 : vector<8x128xf32>
    %cst_30 = arith.constant dense<0.000000e+00> : vector<8x32xf32>
    %36 = tpu.matmul %35, %22, %cst_30 {dimension_numbers = #tpu.dot_dimension_numbers<[1], [0], [0], [1], [0, 0, 1, 1], [], []>} : vector<8x128xf32>, vector<128x32xf32>, vector<8x32xf32> -> vector<8x32xf32>
    %cst_31 = arith.constant dense<0.000000e+00> : vector<8xf32>
    %37 = vector.multi_reduction <add>, %0, %cst_31 [1] : vector<8x32xf32> to vector<8xf32>
    %38 = vector.shape_cast %37 : vector<8xf32> to vector<8x1xf32>
    %cst_32 = arith.constant 3.200000e+01 : f32
    %39 = vector.broadcast %cst_32 : f32 to vector<8x1xf32>
    %40 = arith.divf %38, %39 : vector<8x1xf32>
    %41 = vector.broadcast %40 : vector<8x1xf32> to vector<8x32xf32>
    %42 = arith.subf %0, %41 : vector<8x32xf32>
    %43 = arith.mulf %42, %42 : vector<8x32xf32>
    %cst_33 = arith.constant dense<0.000000e+00> : vector<8xf32>
    %44 = vector.multi_reduction <add>, %43, %cst_33 [1] : vector<8x32xf32> to vector<8xf32>
    %45 = vector.shape_cast %44 : vector<8xf32> to vector<8x1xf32>
    %cst_34 = arith.constant 3.200000e+01 : f32
    %46 = vector.broadcast %cst_34 : f32 to vector<8x1xf32>
    %47 = arith.divf %45, %46 : vector<8x1xf32>
    %cst_35 = arith.constant 9.99999974E-6 : f32
    %48 = vector.broadcast %cst_35 : f32 to vector<8x1xf32>
    %49 = arith.addf %47, %48 : vector<8x1xf32>
    %50 = math.rsqrt %49 : vector<8x1xf32>
    %51 = vector.broadcast %50 : vector<8x1xf32> to vector<8x32xf32>
    %52 = arith.mulf %42, %51 : vector<8x32xf32>
    %53 = vector.broadcast %2 : vector<1x32xf32> to vector<8x32xf32>
    %54 = arith.mulf %52, %53 : vector<8x32xf32>
    %55 = vector.broadcast %3 : vector<1x32xf32> to vector<8x32xf32>
    %56 = arith.addf %54, %55 : vector<8x32xf32>
    %cst_36 = arith.constant dense<0.000000e+00> : vector<8x128xf32>
    %57 = tpu.matmul %56, %16, %cst_36 {dimension_numbers = #tpu.dot_dimension_numbers<[1], [0], [0], [1], [0, 0, 1, 1], [], []>} : vector<8x32xf32>, vector<32x128xf32>, vector<8x128xf32> -> vector<8x128xf32>
    %58 = vector.broadcast %6 : vector<1x128xf32> to vector<8x128xf32>
    %59 = arith.addf %57, %58 : vector<8x128xf32>
    %60 = vector.extract_strided_slice %59 {offsets = [0, 96], sizes = [8, 32], strides = [1, 1]} : vector<8x128xf32> to vector<8x32xf32>
    %61 = arith.negf %60 : vector<8x32xf32>
    %62 = math.exp %61 : vector<8x32xf32>
    %cst_37 = arith.constant 1.000000e+00 : f32
    %63 = vector.broadcast %cst_37 : f32 to vector<8x32xf32>
    %64 = arith.addf %63, %62 : vector<8x32xf32>
    %65 = arith.divf %63, %64 : vector<8x32xf32>
    %66 = vector.extract_strided_slice %59 {offsets = [0, 0], sizes = [8, 8], strides = [1, 1]} : vector<8x128xf32> to vector<8x8xf32>
    %67 = vector.extract_strided_slice %59 {offsets = [0, 32], sizes = [8, 8], strides = [1, 1]} : vector<8x128xf32> to vector<8x8xf32>
    %68 = vector.extract_strided_slice %59 {offsets = [0, 64], sizes = [8, 8], strides = [1, 1]} : vector<8x128xf32> to vector<8x8xf32>
    %cst_38 = arith.constant dense<0.000000e+00> : vector<8x8xf32>
    %69 = tpu.matmul %66, %67, %cst_38 {dimension_numbers = #tpu.dot_dimension_numbers<[1], [1], [0], [0], [0, 0, 1, 0], [], []>} : vector<8x8xf32>, vector<8x8xf32>, vector<8x8xf32> -> vector<8x8xf32>
    %70 = vector.extract_strided_slice %36 {offsets = [0, 0], sizes = [8, 8], strides = [1, 1]} : vector<8x32xf32> to vector<8x8xf32>
    %71 = arith.addf %69, %70 : vector<8x8xf32>
    %cst_39 = arith.constant dense<0xFF800000> : vector<8xf32>
    %72 = vector.multi_reduction <maximumf>, %71, %cst_39 [1] : vector<8x8xf32> to vector<8xf32>
    %73 = vector.shape_cast %72 : vector<8xf32> to vector<8x1xf32>
    %74 = vector.broadcast %73 : vector<8x1xf32> to vector<8x8xf32>
    %75 = arith.subf %71, %74 : vector<8x8xf32>
    %76 = math.exp %75 : vector<8x8xf32>
    %cst_40 = arith.constant dense<0.000000e+00> : vector<8xf32>
    %77 = vector.multi_reduction <add>, %76, %cst_40 [1] : vector<8x8xf32> to vector<8xf32>
    %78 = vector.shape_cast %77 : vector<8xf32> to vector<8x1xf32>
    %79 = tpu.reciprocal %78 {approx = true} : vector<8x1xf32> -> vector<8x1xf32>
    %80 = vector.broadcast %79 : vector<8x1xf32> to vector<8x8xf32>
    %81 = arith.mulf %76, %80 : vector<8x8xf32>
    %cst_41 = arith.constant dense<0.000000e+00> : vector<8x8xf32>
    %82 = tpu.matmul %81, %68, %cst_41 {dimension_numbers = #tpu.dot_dimension_numbers<[1], [0], [0], [1], [0, 0, 1, 1], [], []>} : vector<8x8xf32>, vector<8x8xf32>, vector<8x8xf32> -> vector<8x8xf32>
    %83 = vector.extract_strided_slice %59 {offsets = [0, 8], sizes = [8, 8], strides = [1, 1]} : vector<8x128xf32> to vector<8x8xf32>
    %84 = vector.extract_strided_slice %59 {offsets = [0, 40], sizes = [8, 8], strides = [1, 1]} : vector<8x128xf32> to vector<8x8xf32>
    %85 = vector.extract_strided_slice %59 {offsets = [0, 72], sizes = [8, 8], strides = [1, 1]} : vector<8x128xf32> to vector<8x8xf32>
    %cst_42 = arith.constant dense<0.000000e+00> : vector<8x8xf32>
    %86 = tpu.matmul %83, %84, %cst_42 {dimension_numbers = #tpu.dot_dimension_numbers<[1], [1], [0], [0], [0, 0, 1, 0], [], []>} : vector<8x8xf32>, vector<8x8xf32>, vector<8x8xf32> -> vector<8x8xf32>
    %87 = vector.extract_strided_slice %36 {offsets = [0, 8], sizes = [8, 8], strides = [1, 1]} : vector<8x32xf32> to vector<8x8xf32>
    %88 = arith.addf %86, %87 : vector<8x8xf32>
    %cst_43 = arith.constant dense<0xFF800000> : vector<8xf32>
    %89 = vector.multi_reduction <maximumf>, %88, %cst_43 [1] : vector<8x8xf32> to vector<8xf32>
    %90 = vector.shape_cast %89 : vector<8xf32> to vector<8x1xf32>
    %91 = vector.broadcast %90 : vector<8x1xf32> to vector<8x8xf32>
    %92 = arith.subf %88, %91 : vector<8x8xf32>
    %93 = math.exp %92 : vector<8x8xf32>
    %cst_44 = arith.constant dense<0.000000e+00> : vector<8xf32>
    %94 = vector.multi_reduction <add>, %93, %cst_44 [1] : vector<8x8xf32> to vector<8xf32>
    %95 = vector.shape_cast %94 : vector<8xf32> to vector<8x1xf32>
    %96 = tpu.reciprocal %95 {approx = true} : vector<8x1xf32> -> vector<8x1xf32>
    %97 = vector.broadcast %96 : vector<8x1xf32> to vector<8x8xf32>
    %98 = arith.mulf %93, %97 : vector<8x8xf32>
    %cst_45 = arith.constant dense<0.000000e+00> : vector<8x8xf32>
    %99 = tpu.matmul %98, %85, %cst_45 {dimension_numbers = #tpu.dot_dimension_numbers<[1], [0], [0], [1], [0, 0, 1, 1], [], []>} : vector<8x8xf32>, vector<8x8xf32>, vector<8x8xf32> -> vector<8x8xf32>
    %100 = vector.extract_strided_slice %59 {offsets = [0, 16], sizes = [8, 8], strides = [1, 1]} : vector<8x128xf32> to vector<8x8xf32>
    %101 = vector.extract_strided_slice %59 {offsets = [0, 48], sizes = [8, 8], strides = [1, 1]} : vector<8x128xf32> to vector<8x8xf32>
    %102 = vector.extract_strided_slice %59 {offsets = [0, 80], sizes = [8, 8], strides = [1, 1]} : vector<8x128xf32> to vector<8x8xf32>
    %cst_46 = arith.constant dense<0.000000e+00> : vector<8x8xf32>
    %103 = tpu.matmul %100, %101, %cst_46 {dimension_numbers = #tpu.dot_dimension_numbers<[1], [1], [0], [0], [0, 0, 1, 0], [], []>} : vector<8x8xf32>, vector<8x8xf32>, vector<8x8xf32> -> vector<8x8xf32>
    %104 = vector.extract_strided_slice %36 {offsets = [0, 16], sizes = [8, 8], strides = [1, 1]} : vector<8x32xf32> to vector<8x8xf32>
    %105 = arith.addf %103, %104 : vector<8x8xf32>
    %cst_47 = arith.constant dense<0xFF800000> : vector<8xf32>
    %106 = vector.multi_reduction <maximumf>, %105, %cst_47 [1] : vector<8x8xf32> to vector<8xf32>
    %107 = vector.shape_cast %106 : vector<8xf32> to vector<8x1xf32>
    %108 = vector.broadcast %107 : vector<8x1xf32> to vector<8x8xf32>
    %109 = arith.subf %105, %108 : vector<8x8xf32>
    %110 = math.exp %109 : vector<8x8xf32>
    %cst_48 = arith.constant dense<0.000000e+00> : vector<8xf32>
    %111 = vector.multi_reduction <add>, %110, %cst_48 [1] : vector<8x8xf32> to vector<8xf32>
    %112 = vector.shape_cast %111 : vector<8xf32> to vector<8x1xf32>
    %113 = tpu.reciprocal %112 {approx = true} : vector<8x1xf32> -> vector<8x1xf32>
    %114 = vector.broadcast %113 : vector<8x1xf32> to vector<8x8xf32>
    %115 = arith.mulf %110, %114 : vector<8x8xf32>
    %cst_49 = arith.constant dense<0.000000e+00> : vector<8x8xf32>
    %116 = tpu.matmul %115, %102, %cst_49 {dimension_numbers = #tpu.dot_dimension_numbers<[1], [0], [0], [1], [0, 0, 1, 1], [], []>} : vector<8x8xf32>, vector<8x8xf32>, vector<8x8xf32> -> vector<8x8xf32>
    %117 = vector.extract_strided_slice %59 {offsets = [0, 24], sizes = [8, 8], strides = [1, 1]} : vector<8x128xf32> to vector<8x8xf32>
    %118 = vector.extract_strided_slice %59 {offsets = [0, 56], sizes = [8, 8], strides = [1, 1]} : vector<8x128xf32> to vector<8x8xf32>
    %119 = vector.extract_strided_slice %59 {offsets = [0, 88], sizes = [8, 8], strides = [1, 1]} : vector<8x128xf32> to vector<8x8xf32>
    %cst_50 = arith.constant dense<0.000000e+00> : vector<8x8xf32>
    %120 = tpu.matmul %117, %118, %cst_50 {dimension_numbers = #tpu.dot_dimension_numbers<[1], [1], [0], [0], [0, 0, 1, 0], [], []>} : vector<8x8xf32>, vector<8x8xf32>, vector<8x8xf32> -> vector<8x8xf32>
    %121 = vector.extract_strided_slice %36 {offsets = [0, 24], sizes = [8, 8], strides = [1, 1]} : vector<8x32xf32> to vector<8x8xf32>
    %122 = arith.addf %120, %121 : vector<8x8xf32>
    %cst_51 = arith.constant dense<0xFF800000> : vector<8xf32>
    %123 = vector.multi_reduction <maximumf>, %122, %cst_51 [1] : vector<8x8xf32> to vector<8xf32>
    %124 = vector.shape_cast %123 : vector<8xf32> to vector<8x1xf32>
    %125 = vector.broadcast %124 : vector<8x1xf32> to vector<8x8xf32>
    %126 = arith.subf %122, %125 : vector<8x8xf32>
    %127 = math.exp %126 : vector<8x8xf32>
    %cst_52 = arith.constant dense<0.000000e+00> : vector<8xf32>
    %128 = vector.multi_reduction <add>, %127, %cst_52 [1] : vector<8x8xf32> to vector<8xf32>
    %129 = vector.shape_cast %128 : vector<8xf32> to vector<8x1xf32>
    %130 = tpu.reciprocal %129 {approx = true} : vector<8x1xf32> -> vector<8x1xf32>
    %131 = vector.broadcast %130 : vector<8x1xf32> to vector<8x8xf32>
    %132 = arith.mulf %127, %131 : vector<8x8xf32>
    %cst_53 = arith.constant dense<0.000000e+00> : vector<8x8xf32>
    %133 = tpu.matmul %132, %119, %cst_53 {dimension_numbers = #tpu.dot_dimension_numbers<[1], [0], [0], [1], [0, 0, 1, 1], [], []>} : vector<8x8xf32>, vector<8x8xf32>, vector<8x8xf32> -> vector<8x8xf32>
    %134 = tpu.concatenate %82, %99, %116, %133 in 1 : vector<8x8xf32>, vector<8x8xf32>, vector<8x8xf32>, vector<8x8xf32> -> vector<8x32xf32>
    %135 = arith.mulf %134, %65 : vector<8x32xf32>
    %cst_54 = arith.constant dense<0.000000e+00> : vector<8x32xf32>
    %136 = tpu.matmul %135, %19, %cst_54 {dimension_numbers = #tpu.dot_dimension_numbers<[1], [0], [0], [1], [0, 0, 1, 1], [], []>} : vector<8x32xf32>, vector<32x32xf32>, vector<8x32xf32> -> vector<8x32xf32>
    %137 = vector.broadcast %7 : vector<1x32xf32> to vector<8x32xf32>
    %138 = arith.addf %136, %137 : vector<8x32xf32>
    %139 = arith.addf %0, %138 : vector<8x32xf32>
    %cst_55 = arith.constant dense<0.000000e+00> : vector<8xf32>
    %140 = vector.multi_reduction <add>, %139, %cst_55 [1] : vector<8x32xf32> to vector<8xf32>
    %141 = vector.shape_cast %140 : vector<8xf32> to vector<8x1xf32>
    %cst_56 = arith.constant 3.200000e+01 : f32
    %142 = vector.broadcast %cst_56 : f32 to vector<8x1xf32>
    %143 = arith.divf %141, %142 : vector<8x1xf32>
    %144 = vector.broadcast %143 : vector<8x1xf32> to vector<8x32xf32>
    %145 = arith.subf %139, %144 : vector<8x32xf32>
    %146 = arith.mulf %145, %145 : vector<8x32xf32>
    %cst_57 = arith.constant dense<0.000000e+00> : vector<8xf32>
    %147 = vector.multi_reduction <add>, %146, %cst_57 [1] : vector<8x32xf32> to vector<8xf32>
    %148 = vector.shape_cast %147 : vector<8xf32> to vector<8x1xf32>
    %cst_58 = arith.constant 3.200000e+01 : f32
    %149 = vector.broadcast %cst_58 : f32 to vector<8x1xf32>
    %150 = arith.divf %148, %149 : vector<8x1xf32>
    %cst_59 = arith.constant 9.99999974E-6 : f32
    %151 = vector.broadcast %cst_59 : f32 to vector<8x1xf32>
    %152 = arith.addf %150, %151 : vector<8x1xf32>
    %153 = math.rsqrt %152 : vector<8x1xf32>
    %154 = vector.broadcast %153 : vector<8x1xf32> to vector<8x32xf32>
    %155 = arith.mulf %145, %154 : vector<8x32xf32>
    %156 = vector.broadcast %8 : vector<1x32xf32> to vector<8x32xf32>
    %157 = arith.mulf %155, %156 : vector<8x32xf32>
    %158 = vector.broadcast %9 : vector<1x32xf32> to vector<8x32xf32>
    %159 = arith.addf %157, %158 : vector<8x32xf32>
    %cst_60 = arith.constant dense<0.000000e+00> : vector<8x128xf32>
    %160 = tpu.matmul %159, %17, %cst_60 {dimension_numbers = #tpu.dot_dimension_numbers<[1], [0], [0], [1], [0, 0, 1, 1], [], []>} : vector<8x32xf32>, vector<32x128xf32>, vector<8x128xf32> -> vector<8x128xf32>
    %161 = vector.broadcast %10 : vector<1x128xf32> to vector<8x128xf32>
    %162 = arith.addf %160, %161 : vector<8x128xf32>
    %163 = vector.extract_strided_slice %162 {offsets = [0, 96], sizes = [8, 32], strides = [1, 1]} : vector<8x128xf32> to vector<8x32xf32>
    %164 = arith.negf %163 : vector<8x32xf32>
    %165 = math.exp %164 : vector<8x32xf32>
    %cst_61 = arith.constant 1.000000e+00 : f32
    %166 = vector.broadcast %cst_61 : f32 to vector<8x32xf32>
    %167 = arith.addf %166, %165 : vector<8x32xf32>
    %168 = arith.divf %166, %167 : vector<8x32xf32>
    %169 = vector.extract_strided_slice %162 {offsets = [0, 0], sizes = [8, 8], strides = [1, 1]} : vector<8x128xf32> to vector<8x8xf32>
    %170 = vector.extract_strided_slice %162 {offsets = [0, 32], sizes = [8, 8], strides = [1, 1]} : vector<8x128xf32> to vector<8x8xf32>
    %171 = vector.extract_strided_slice %162 {offsets = [0, 64], sizes = [8, 8], strides = [1, 1]} : vector<8x128xf32> to vector<8x8xf32>
    %cst_62 = arith.constant dense<0.000000e+00> : vector<8x8xf32>
    %172 = tpu.matmul %169, %170, %cst_62 {dimension_numbers = #tpu.dot_dimension_numbers<[1], [1], [0], [0], [0, 0, 1, 0], [], []>} : vector<8x8xf32>, vector<8x8xf32>, vector<8x8xf32> -> vector<8x8xf32>
    %cst_63 = arith.constant dense<0xFF800000> : vector<8xf32>
    %173 = vector.multi_reduction <maximumf>, %172, %cst_63 [1] : vector<8x8xf32> to vector<8xf32>
    %174 = vector.shape_cast %173 : vector<8xf32> to vector<8x1xf32>
    %175 = vector.broadcast %174 : vector<8x1xf32> to vector<8x8xf32>
    %176 = arith.subf %172, %175 : vector<8x8xf32>
    %177 = math.exp %176 : vector<8x8xf32>
    %cst_64 = arith.constant dense<0.000000e+00> : vector<8xf32>
    %178 = vector.multi_reduction <add>, %177, %cst_64 [1] : vector<8x8xf32> to vector<8xf32>
    %179 = vector.shape_cast %178 : vector<8xf32> to vector<8x1xf32>
    %180 = tpu.reciprocal %179 {approx = true} : vector<8x1xf32> -> vector<8x1xf32>
    %181 = vector.broadcast %180 : vector<8x1xf32> to vector<8x8xf32>
    %182 = arith.mulf %177, %181 : vector<8x8xf32>
    %cst_65 = arith.constant dense<0.000000e+00> : vector<8x8xf32>
    %183 = tpu.matmul %182, %171, %cst_65 {dimension_numbers = #tpu.dot_dimension_numbers<[1], [0], [0], [1], [0, 0, 1, 1], [], []>} : vector<8x8xf32>, vector<8x8xf32>, vector<8x8xf32> -> vector<8x8xf32>
    %184 = vector.extract_strided_slice %162 {offsets = [0, 8], sizes = [8, 8], strides = [1, 1]} : vector<8x128xf32> to vector<8x8xf32>
    %185 = vector.extract_strided_slice %162 {offsets = [0, 40], sizes = [8, 8], strides = [1, 1]} : vector<8x128xf32> to vector<8x8xf32>
    %186 = vector.extract_strided_slice %162 {offsets = [0, 72], sizes = [8, 8], strides = [1, 1]} : vector<8x128xf32> to vector<8x8xf32>
    %cst_66 = arith.constant dense<0.000000e+00> : vector<8x8xf32>
    %187 = tpu.matmul %184, %185, %cst_66 {dimension_numbers = #tpu.dot_dimension_numbers<[1], [1], [0], [0], [0, 0, 1, 0], [], []>} : vector<8x8xf32>, vector<8x8xf32>, vector<8x8xf32> -> vector<8x8xf32>
    %cst_67 = arith.constant dense<0xFF800000> : vector<8xf32>
    %188 = vector.multi_reduction <maximumf>, %187, %cst_67 [1] : vector<8x8xf32> to vector<8xf32>
    %189 = vector.shape_cast %188 : vector<8xf32> to vector<8x1xf32>
    %190 = vector.broadcast %189 : vector<8x1xf32> to vector<8x8xf32>
    %191 = arith.subf %187, %190 : vector<8x8xf32>
    %192 = math.exp %191 : vector<8x8xf32>
    %cst_68 = arith.constant dense<0.000000e+00> : vector<8xf32>
    %193 = vector.multi_reduction <add>, %192, %cst_68 [1] : vector<8x8xf32> to vector<8xf32>
    %194 = vector.shape_cast %193 : vector<8xf32> to vector<8x1xf32>
    %195 = tpu.reciprocal %194 {approx = true} : vector<8x1xf32> -> vector<8x1xf32>
    %196 = vector.broadcast %195 : vector<8x1xf32> to vector<8x8xf32>
    %197 = arith.mulf %192, %196 : vector<8x8xf32>
    %cst_69 = arith.constant dense<0.000000e+00> : vector<8x8xf32>
    %198 = tpu.matmul %197, %186, %cst_69 {dimension_numbers = #tpu.dot_dimension_numbers<[1], [0], [0], [1], [0, 0, 1, 1], [], []>} : vector<8x8xf32>, vector<8x8xf32>, vector<8x8xf32> -> vector<8x8xf32>
    %199 = vector.extract_strided_slice %162 {offsets = [0, 16], sizes = [8, 8], strides = [1, 1]} : vector<8x128xf32> to vector<8x8xf32>
    %200 = vector.extract_strided_slice %162 {offsets = [0, 48], sizes = [8, 8], strides = [1, 1]} : vector<8x128xf32> to vector<8x8xf32>
    %201 = vector.extract_strided_slice %162 {offsets = [0, 80], sizes = [8, 8], strides = [1, 1]} : vector<8x128xf32> to vector<8x8xf32>
    %cst_70 = arith.constant dense<0.000000e+00> : vector<8x8xf32>
    %202 = tpu.matmul %199, %200, %cst_70 {dimension_numbers = #tpu.dot_dimension_numbers<[1], [1], [0], [0], [0, 0, 1, 0], [], []>} : vector<8x8xf32>, vector<8x8xf32>, vector<8x8xf32> -> vector<8x8xf32>
    %cst_71 = arith.constant dense<0xFF800000> : vector<8xf32>
    %203 = vector.multi_reduction <maximumf>, %202, %cst_71 [1] : vector<8x8xf32> to vector<8xf32>
    %204 = vector.shape_cast %203 : vector<8xf32> to vector<8x1xf32>
    %205 = vector.broadcast %204 : vector<8x1xf32> to vector<8x8xf32>
    %206 = arith.subf %202, %205 : vector<8x8xf32>
    %207 = math.exp %206 : vector<8x8xf32>
    %cst_72 = arith.constant dense<0.000000e+00> : vector<8xf32>
    %208 = vector.multi_reduction <add>, %207, %cst_72 [1] : vector<8x8xf32> to vector<8xf32>
    %209 = vector.shape_cast %208 : vector<8xf32> to vector<8x1xf32>
    %210 = tpu.reciprocal %209 {approx = true} : vector<8x1xf32> -> vector<8x1xf32>
    %211 = vector.broadcast %210 : vector<8x1xf32> to vector<8x8xf32>
    %212 = arith.mulf %207, %211 : vector<8x8xf32>
    %cst_73 = arith.constant dense<0.000000e+00> : vector<8x8xf32>
    %213 = tpu.matmul %212, %201, %cst_73 {dimension_numbers = #tpu.dot_dimension_numbers<[1], [0], [0], [1], [0, 0, 1, 1], [], []>} : vector<8x8xf32>, vector<8x8xf32>, vector<8x8xf32> -> vector<8x8xf32>
    %214 = vector.extract_strided_slice %162 {offsets = [0, 24], sizes = [8, 8], strides = [1, 1]} : vector<8x128xf32> to vector<8x8xf32>
    %215 = vector.extract_strided_slice %162 {offsets = [0, 56], sizes = [8, 8], strides = [1, 1]} : vector<8x128xf32> to vector<8x8xf32>
    %216 = vector.extract_strided_slice %162 {offsets = [0, 88], sizes = [8, 8], strides = [1, 1]} : vector<8x128xf32> to vector<8x8xf32>
    %cst_74 = arith.constant dense<0.000000e+00> : vector<8x8xf32>
    %217 = tpu.matmul %214, %215, %cst_74 {dimension_numbers = #tpu.dot_dimension_numbers<[1], [1], [0], [0], [0, 0, 1, 0], [], []>} : vector<8x8xf32>, vector<8x8xf32>, vector<8x8xf32> -> vector<8x8xf32>
    %cst_75 = arith.constant dense<0xFF800000> : vector<8xf32>
    %218 = vector.multi_reduction <maximumf>, %217, %cst_75 [1] : vector<8x8xf32> to vector<8xf32>
    %219 = vector.shape_cast %218 : vector<8xf32> to vector<8x1xf32>
    %220 = vector.broadcast %219 : vector<8x1xf32> to vector<8x8xf32>
    %221 = arith.subf %217, %220 : vector<8x8xf32>
    %222 = math.exp %221 : vector<8x8xf32>
    %cst_76 = arith.constant dense<0.000000e+00> : vector<8xf32>
    %223 = vector.multi_reduction <add>, %222, %cst_76 [1] : vector<8x8xf32> to vector<8xf32>
    %224 = vector.shape_cast %223 : vector<8xf32> to vector<8x1xf32>
    %225 = tpu.reciprocal %224 {approx = true} : vector<8x1xf32> -> vector<8x1xf32>
    %226 = vector.broadcast %225 : vector<8x1xf32> to vector<8x8xf32>
    %227 = arith.mulf %222, %226 : vector<8x8xf32>
    %cst_77 = arith.constant dense<0.000000e+00> : vector<8x8xf32>
    %228 = tpu.matmul %227, %216, %cst_77 {dimension_numbers = #tpu.dot_dimension_numbers<[1], [0], [0], [1], [0, 0, 1, 1], [], []>} : vector<8x8xf32>, vector<8x8xf32>, vector<8x8xf32> -> vector<8x8xf32>
    %229 = tpu.concatenate %183, %198, %213, %228 in 1 : vector<8x8xf32>, vector<8x8xf32>, vector<8x8xf32>, vector<8x8xf32> -> vector<8x32xf32>
    %230 = arith.mulf %229, %168 : vector<8x32xf32>
    %cst_78 = arith.constant dense<0.000000e+00> : vector<8x32xf32>
    %231 = tpu.matmul %230, %20, %cst_78 {dimension_numbers = #tpu.dot_dimension_numbers<[1], [0], [0], [1], [0, 0, 1, 1], [], []>} : vector<8x32xf32>, vector<32x32xf32>, vector<8x32xf32> -> vector<8x32xf32>
    %232 = vector.broadcast %11 : vector<1x32xf32> to vector<8x32xf32>
    %233 = arith.addf %231, %232 : vector<8x32xf32>
    %234 = arith.addf %139, %233 : vector<8x32xf32>
    %cst_79 = arith.constant dense<0.000000e+00> : vector<8xf32>
    %235 = vector.multi_reduction <add>, %234, %cst_79 [1] : vector<8x32xf32> to vector<8xf32>
    %236 = vector.shape_cast %235 : vector<8xf32> to vector<8x1xf32>
    %cst_80 = arith.constant 3.200000e+01 : f32
    %237 = vector.broadcast %cst_80 : f32 to vector<8x1xf32>
    %238 = arith.divf %236, %237 : vector<8x1xf32>
    %239 = vector.broadcast %238 : vector<8x1xf32> to vector<8x32xf32>
    %240 = arith.subf %234, %239 : vector<8x32xf32>
    %241 = arith.mulf %240, %240 : vector<8x32xf32>
    %cst_81 = arith.constant dense<0.000000e+00> : vector<8xf32>
    %242 = vector.multi_reduction <add>, %241, %cst_81 [1] : vector<8x32xf32> to vector<8xf32>
    %243 = vector.shape_cast %242 : vector<8xf32> to vector<8x1xf32>
    %cst_82 = arith.constant 3.200000e+01 : f32
    %244 = vector.broadcast %cst_82 : f32 to vector<8x1xf32>
    %245 = arith.divf %243, %244 : vector<8x1xf32>
    %cst_83 = arith.constant 9.99999974E-6 : f32
    %246 = vector.broadcast %cst_83 : f32 to vector<8x1xf32>
    %247 = arith.addf %245, %246 : vector<8x1xf32>
    %248 = math.rsqrt %247 : vector<8x1xf32>
    %249 = vector.broadcast %248 : vector<8x1xf32> to vector<8x32xf32>
    %250 = arith.mulf %240, %249 : vector<8x32xf32>
    %251 = vector.broadcast %12 : vector<1x32xf32> to vector<8x32xf32>
    %252 = arith.mulf %250, %251 : vector<8x32xf32>
    %253 = vector.broadcast %13 : vector<1x32xf32> to vector<8x32xf32>
    %254 = arith.addf %252, %253 : vector<8x32xf32>
    %cst_84 = arith.constant dense<0.000000e+00> : vector<8x128xf32>
    %255 = tpu.matmul %254, %18, %cst_84 {dimension_numbers = #tpu.dot_dimension_numbers<[1], [0], [0], [1], [0, 0, 1, 1], [], []>} : vector<8x32xf32>, vector<32x128xf32>, vector<8x128xf32> -> vector<8x128xf32>
    %256 = vector.broadcast %14 : vector<1x128xf32> to vector<8x128xf32>
    %257 = arith.addf %255, %256 : vector<8x128xf32>
    %cst_85 = arith.constant 0.000000e+00 : f32
    %258 = vector.broadcast %cst_85 : f32 to vector<8x128xf32>
    %259 = arith.maximumf %257, %258 : vector<8x128xf32>
    %cst_86 = arith.constant dense<0.000000e+00> : vector<8x32xf32>
    %260 = tpu.matmul %259, %23, %cst_86 {dimension_numbers = #tpu.dot_dimension_numbers<[1], [0], [0], [1], [0, 0, 1, 1], [], []>} : vector<8x128xf32>, vector<128x32xf32>, vector<8x32xf32> -> vector<8x32xf32>
    %261 = arith.addf %234, %260 : vector<8x32xf32>
    %262 = vector.broadcast %15 : vector<1x32xf32> to vector<8x32xf32>
    %263 = arith.addf %261, %262 : vector<8x32xf32>
    %c0_87 = arith.constant 0 : index
    %c0_88 = arith.constant 0 : index
    %264 = vector.load %arg4[%c0_87, %c0_88] : memref<8x32xf32, #tpu.memory_space<vmem>>, vector<8x32xf32>
    tpu.vector_store %arg4[%c0_87, %c0_88], %263 {strides = array<i32>} : memref<8x32xf32, #tpu.memory_space<vmem>>, vector<8x32xf32>,
    return
  }
}

</mosaic_0001>

<llo_original>
// kernel: single_transformer_block.1
$region0: #{single_transformer_block.1}
  #allocation0 [shape = 'u32[]', space=smem, size = 0x4, offset = 0x4, fixed_abs, tag = 'smem constant byte address 0x4 - core index']
  #allocation1 [shape = 'u32[144,128]{1,0:T(1,128)}', space=vmem, size = 0x12000, scoped, tag = 'internal scratch']
  %s0 = inlined_call_operand.vmem [shape: f32[8,32], index: 0, kind: input, shape index: {}]
  %s1 = inlined_call_operand.vmem [shape: f32[8,128], index: 1, kind: input, shape index: {}]
  %s2 = inlined_call_operand.vmem [shape: f32[32,576], index: 2, kind: input, shape index: {}]
  %s3 = inlined_call_operand.vmem [shape: f32[128,192], index: 3, kind: input, shape index: {}]
  %s4 = inlined_call_operand.hbm [shape: f32[8,32], index: 4, kind: output, shape index: {}]
  %s5 = sld [smem:[#allocation0]]
  $region26: #{single_transformer_block.1} parent=0
    _
  %s7 = ssub.s32 1, %s5
  %s8 = scalar_select 0, %s7, %s5
  $region1: #{single_transformer_block.1} parent=0
    #allocation2 [shape = 'u8[4096]{0}', space=vmem, size = 0x1000, scoped, tag = 'output window, operand 0, single buffered']
    #allocation3 [shape = 's32[1]{0}', space=sflag, size = 0x4, scoped, tag = 'scoped memory for single_transformer_block.1']
    %9 = vsyncpa [#allocation3], 0
    // Predicated region
    $region2: #{single_transformer_block.1} parent=1 // pred_check
      _
    $region3: #{single_transformer_block.1} parent=1 // pred_check_branch
      %11 = sbr.rel (0) target = $region5
    $region4: #{single_transformer_block.1} parent=1 // pred_region
      _
    $region5: #{single_transformer_block.1} parent=1 // pred_fallthru
      _
    // Predicated region
    $region6: #{single_transformer_block.1} parent=1 // pred_check
      _
    $region7: #{single_transformer_block.1} parent=1 // pred_check_branch
      %13 = sbr.rel (0) target = $region9
    $region8: #{single_transformer_block.1} parent=1 // pred_region
      _
    $region9: #{single_transformer_block.1} parent=1 // pred_fallthru
      _
    // Predicated region
    $region10: #{single_transformer_block.1} parent=1 // pred_check
      _
    $region11: #{single_transformer_block.1} parent=1 // pred_check_branch
      %15 = sbr.rel (0) target = $region13
    $region12: #{single_transformer_block.1} parent=1 // pred_region
      _
    $region13: #{single_transformer_block.1} parent=1 // pred_fallthru
      _
    // Predicated region
    $region14: #{single_transformer_block.1} parent=1 // pred_check
      _
    $region15: #{single_transformer_block.1} parent=1 // pred_check_branch
      %17 = sbr.rel (0) target = $region17
    $region16: #{single_transformer_block.1} parent=1 // pred_region
      _
    $region17: #{single_transformer_block.1} parent=1 // pred_fallthru
      _
    %v18 = vld [vmem:[%s0] sm:$0xff]
    %v19 = vld [vmem:[%s1] sm:$0xff]
    %v20 = vld [vmem:[%s2 + $0x18] ss:$0 sm:$0xff]
    %v21 = vld [vmem:[%s2 + $0x19] ss:$0 sm:$0xff]
    %v22 = vld [vmem:[%s2 + $0x1a] ss:$0 sm:$0xff]
    %v23 = vld [vmem:[%s2 + $0x1b] ss:$0 sm:$0xff]
    %v24 = vld [vmem:[%s2 + $0x1c] ss:$0 sm:$0xff]
    %v25 = vld [vmem:[%s2 + $0x1d] ss:$0 sm:$0xff]
    %v26 = vld [vmem:[%s2 + $0x1e] ss:$0 sm:$0xff]
    %v27 = vld [vmem:[%s2 + $0x1f] ss:$0 sm:$0xff]
    %v28 = vld [vmem:[%s2 + $0x40] ss:$0 sm:$0xff]
    %v29 = vld [vmem:[%s2 + $0x41] ss:$0 sm:$0xff]
    %v30 = vld [vmem:[%s2 + $0x42] ss:$0 sm:$0xff]
    %v31 = vld [vmem:[%s2 + $0x43] ss:$0 sm:$0xff]
    %v32 = vld [vmem:[%s2 + $0x44] ss:$0 sm:$0xff]
    %v33 = vld [vmem:[%s2 + $0x45] ss:$0 sm:$0xff]
    %v34 = vld [vmem:[%s2] sm:$0xff]
    %v35 = vld [vmem:[%s2 + $0x28] sm:$0xff]
    %v36 = vld [vmem:[%s2 + $0x50] sm:$0xff]
    %v37 = vld [vmem:[%s2 + $0x78] sm:$0xff]
    %v38 = vld [vmem:[%s2 + $0x8] sm:$0xff]
    %v39 = vld [vmem:[%s2 + $0x30] sm:$0xff]
    %v40 = vld [vmem:[%s2 + $0x58] sm:$0xff]
    %v41 = vld [vmem:[%s2 + $0x80] sm:$0xff]
    %v42 = vld [vmem:[%s2 + $0x10] sm:$0xff]
    %v43 = vld [vmem:[%s2 + $0x38] sm:$0xff]
    %v44 = vld [vmem:[%s2 + $0x60] sm:$0xff]
    %v45 = vld [vmem:[%s2 + $0x88] sm:$0xff]
    %v46 = vld [vmem:[%s2 + $0x20] sm:$0xff]
    %v47 = vld [vmem:[%s2 + $0x48] sm:$0xff]
    %v48 = vld [vmem:[%s2 + $0x70] sm:$0xff]
    %v49 = vld [vmem:[%s2 + $0x98] sm:$0xff]
    %v50 = vld [vmem:[%s3] sm:$0xff]
    %v51 = vld [vmem:[%s3 + $0x10] sm:$0xff]
    %v52 = vld [vmem:[%s3 + $0x20] sm:$0xff]
    %v53 = vld [vmem:[%s3 + $0x30] sm:$0xff]
    %v54 = vld [vmem:[%s3 + $0x40] sm:$0xff]
    %v55 = vld [vmem:[%s3 + $0x50] sm:$0xff]
    %v56 = vld [vmem:[%s3 + $0x60] sm:$0xff]
    %v57 = vld [vmem:[%s3 + $0x70] sm:$0xff]
    %v58 = vld [vmem:[%s3 + $0x80] sm:$0xff]
    %v59 = vld [vmem:[%s3 + $0x90] sm:$0xff]
    %v60 = vld [vmem:[%s3 + $0xa0] sm:$0xff]
    %v61 = vld [vmem:[%s3 + $0xb0] sm:$0xff]
    %v62 = vld [vmem:[%s3 + $0xc0] sm:$0xff]
    %v63 = vld [vmem:[%s3 + $0xd0] sm:$0xff]
    %v64 = vld [vmem:[%s3 + $0xe0] sm:$0xff]
    %v65 = vld [vmem:[%s3 + $0xf0] sm:$0xff]
    %v66 = vld [vmem:[%s3 + $0x8] sm:$0xff]
    %v67 = vld [vmem:[%s3 + $0x18] sm:$0xff]
    %v68 = vld [vmem:[%s3 + $0x28] sm:$0xff]
    %v69 = vld [vmem:[%s3 + $0x38] sm:$0xff]
    %v70 = vld [vmem:[%s3 + $0x48] sm:$0xff]
    %v71 = vld [vmem:[%s3 + $0x58] sm:$0xff]
    %v72 = vld [vmem:[%s3 + $0x68] sm:$0xff]
    %v73 = vld [vmem:[%s3 + $0x78] sm:$0xff]
    %v74 = vld [vmem:[%s3 + $0x88] sm:$0xff]
    %v75 = vld [vmem:[%s3 + $0x98] sm:$0xff]
    %v76 = vld [vmem:[%s3 + $0xa8] sm:$0xff]
    %v77 = vld [vmem:[%s3 + $0xb8] sm:$0xff]
    %v78 = vld [vmem:[%s3 + $0xc8] sm:$0xff]
    %v79 = vld [vmem:[%s3 + $0xd8] sm:$0xff]
    %v80 = vld [vmem:[%s3 + $0xe8] sm:$0xff]
    %v81 = vld [vmem:[%s3 + $0xf8] sm:$0xff]
    %82 = vmatprep.subr.mxu0 0.0
    %83 = vmatpush1.msra.mxu0 %v50
    %84 = vmatprep.subr.mxu0 0.0
    %85 = vmatpush1.msra.mxu0 %v51
    %86 = vmatprep.subr.mxu0 0.0
    %87 = vmatpush1.msra.mxu0 %v52
    %88 = vmatprep.subr.mxu0 0.0
    %89 = vmatpush1.msra.mxu0 %v53
    %90 = vmatprep.subr.mxu0 0.0
    %91 = vmatpush1.msra.mxu0 %v54
    %92 = vmatprep.subr.mxu0 0.0
    %93 = vmatpush1.msra.mxu0 %v55
    %94 = vmatprep.subr.mxu0 0.0
    %95 = vmatpush1.msra.mxu0 %v56
    %96 = vmatprep.subr.mxu0 0.0
    %97 = vmatpush1.msra.mxu0 %v57
    %98 = vmatprep.subr.mxu0 0.0
    %99 = vmatpush1.msra.mxu0 %v58
    %100 = vmatprep.subr.mxu0 0.0
    %101 = vmatpush1.msra.mxu0 %v59
    %102 = vmatprep.subr.mxu0 0.0
    %103 = vmatpush1.msra.mxu0 %v60
    %104 = vmatprep.subr.mxu0 0.0
    %105 = vmatpush1.msra.mxu0 %v61
    %106 = vmatprep.subr.mxu0 0.0
    %107 = vmatpush1.msra.mxu0 %v62
    %108 = vmatprep.subr.mxu0 0.0
    %109 = vmatpush1.msra.mxu0 %v63
    %110 = vmatprep.subr.mxu0 0.0
    %111 = vmatpush1.msra.mxu0 %v64
    %112 = vmatprep.subr.mxu0 0.0
    %113 = vmatpush1.msra.mxu0 %v65
    %114 = vmatprep.subr.mxu0 0.0
    %115 = vmatpush1.msra.mxu0 0.0
    %116 = vmatprep.subr.mxu0 0.0
    %117 = vmatpush1.msra.mxu0 0.0
    %118 = vmatprep.subr.mxu0 0.0
    %119 = vmatpush1.msra.mxu0 0.0
    %120 = vmatprep.subr.mxu0 0.0
    %121 = vmatpush1.msra.mxu0 0.0
    %122 = vmatprep.subr.mxu0 0.0
    %123 = vmatpush1.msra.mxu0 0.0
    %124 = vmatprep.subr.mxu0 0.0
    %125 = vmatpush1.msra.mxu0 0.0
    %126 = vmatprep.subr.mxu0 0.0
    %127 = vmatpush1.msra.mxu0 0.0
    %128 = vmatprep.subr.mxu0 0.0
    %129 = vmatpush1.msra.mxu0 0.0
    %130 = vmatprep.subr.mxu0 0.0
    %131 = vmatpush1.msra.mxu0 0.0
    %132 = vmatprep.subr.mxu0 0.0
    %133 = vmatpush1.msra.mxu0 0.0
    %134 = vmatprep.subr.mxu0 0.0
    %135 = vmatpush1.msra.mxu0 0.0
    %136 = vmatprep.subr.mxu0 0.0
    %137 = vmatpush1.msra.mxu0 0.0
    %138 = vmatprep.subr.mxu0 0.0
    %139 = vmatpush1.msra.mxu0 0.0
    %140 = vmatprep.subr.mxu0 0.0
    %141 = vmatpush1.msra.mxu0 0.0
    %142 = vmatprep.subr.mxu0 0.0
    %143 = vmatpush1.msra.mxu0 0.0
    %144 = vmatprep.subr.mxu0 0.0
    %145 = vmatpush1.msra.mxu0 0.0
    %146 = vmatprep.mubr.f32.mxu0 0.0
    %147 = vmatmul.mubr.f32.gmra.mrb[0].mxu0 %v19
    %v148 = vpop.f32.mrb[0].mxu0
    %v149 = vadd.f32 0.0, %v148
    %v150 = vpop.f32.mrb[0].mxu0
    %151 = vdwg.mxu0
    %v152 = vsub.f32 %v19, %v149
    %v153 = vmul.f32 %v152, %v152
    %154 = vmatprep.subr.mxu0 0.0
    %155 = vmatpush1.msra.mxu0 %v50
    %156 = vmatprep.subr.mxu0 0.0
    %157 = vmatpush1.msra.mxu0 %v51
    %158 = vmatprep.subr.mxu0 0.0
    %159 = vmatpush1.msra.mxu0 %v52
    %160 = vmatprep.subr.mxu0 0.0
    %161 = vmatpush1.msra.mxu0 %v53
    %162 = vmatprep.subr.mxu0 0.0
    %163 = vmatpush1.msra.mxu0 %v54
    %164 = vmatprep.subr.mxu0 0.0
    %165 = vmatpush1.msra.mxu0 %v55
    %166 = vmatprep.subr.mxu0 0.0
    %167 = vmatpush1.msra.mxu0 %v56
    %168 = vmatprep.subr.mxu0 0.0
    %169 = vmatpush1.msra.mxu0 %v57
    %170 = vmatprep.subr.mxu0 0.0
    %171 = vmatpush1.msra.mxu0 %v58
    %172 = vmatprep.subr.mxu0 0.0
    %173 = vmatpush1.msra.mxu0 %v59
    %174 = vmatprep.subr.mxu0 0.0
    %175 = vmatpush1.msra.mxu0 %v60
    %176 = vmatprep.subr.mxu0 0.0
    %177 = vmatpush1.msra.mxu0 %v61
    %178 = vmatprep.subr.mxu0 0.0
    %179 = vmatpush1.msra.mxu0 %v62
    %180 = vmatprep.subr.mxu0 0.0
    %181 = vmatpush1.msra.mxu0 %v63
    %182 = vmatprep.subr.mxu0 0.0
    %183 = vmatpush1.msra.mxu0 %v64
    %184 = vmatprep.subr.mxu0 0.0
    %185 = vmatpush1.msra.mxu0 %v65
    %186 = vmatprep.subr.mxu0 0.0
    %187 = vmatpush1.msra.mxu0 0.0
    %188 = vmatprep.subr.mxu0 0.0
    %189 = vmatpush1.msra.mxu0 0.0
    %190 = vmatprep.subr.mxu0 0.0
    %191 = vmatpush1.msra.mxu0 0.0
    %192 = vmatprep.subr.mxu0 0.0
    %193 = vmatpush1.msra.mxu0 0.0
    %194 = vmatprep.subr.mxu0 0.0
    %195 = vmatpush1.msra.mxu0 0.0
    %196 = vmatprep.subr.mxu0 0.0
    %197 = vmatpush1.msra.mxu0 0.0
    %198 = vmatprep.subr.mxu0 0.0
    %199 = vmatpush1.msra.mxu0 0.0
    %200 = vmatprep.subr.mxu0 0.0
    %201 = vmatpush1.msra.mxu0 0.0
    %202 = vmatprep.subr.mxu0 0.0
    %203 = vmatpush1.msra.mxu0 0.0
    %204 = vmatprep.subr.mxu0 0.0
    %205 = vmatpush1.msra.mxu0 0.0
    %206 = vmatprep.subr.mxu0 0.0
    %207 = vmatpush1.msra.mxu0 0.0
    %208 = vmatprep.subr.mxu0 0.0
    %209 = vmatpush1.msra.mxu0 0.0
    %210 = vmatprep.subr.mxu0 0.0
    %211 = vmatpush1.msra.mxu0 0.0
    %212 = vmatprep.subr.mxu0 0.0
    %213 = vmatpush1.msra.mxu0 0.0
    %214 = vmatprep.subr.mxu0 0.0
    %215 = vmatpush1.msra.mxu0 0.0
    %216 = vmatprep.subr.mxu0 0.0
    %217 = vmatpush1.msra.mxu0 0.0
    %218 = vmatprep.mubr.f32.mxu0 0.0
    %219 = vmatmul.mubr.f32.gmra.mrb[0].mxu0 %v153
    %v220 = vpop.f32.mrb[0].mxu0
    %v221 = vadd.f32 1e-05, %v220
    %v222 = vpop.f32.mrb[0].mxu0
    %223 = vdwg.mxu0
    %v224 = vrsqrt.pop %v221
    %v225 = vmul.f32 %v152, %v224
    %v226 = vmul.f32 %v225, %v22
    %v227 = vadd.f32 %v226, %v23
    %228 = vmatprep.subr.mxu0 0.0
    %229 = vmatpush1.msra.mxu0 %v66
    %230 = vmatprep.subr.mxu0 0.0
    %231 = vmatpush1.msra.mxu0 %v67
    %232 = vmatprep.subr.mxu0 0.0
    %233 = vmatpush1.msra.mxu0 %v68
    %234 = vmatprep.subr.mxu0 0.0
    %235 = vmatpush1.msra.mxu0 %v69
    %236 = vmatprep.subr.mxu0 0.0
    %237 = vmatpush1.msra.mxu0 %v70
    %238 = vmatprep.subr.mxu0 0.0
    %239 = vmatpush1.msra.mxu0 %v71
    %240 = vmatprep.subr.mxu0 0.0
    %241 = vmatpush1.msra.mxu0 %v72
    %242 = vmatprep.subr.mxu0 0.0
    %243 = vmatpush1.msra.mxu0 %v73
    %244 = vmatprep.subr.mxu0 0.0
    %245 = vmatpush1.msra.mxu0 %v74
    %246 = vmatprep.subr.mxu0 0.0
    %247 = vmatpush1.msra.mxu0 %v75
    %248 = vmatprep.subr.mxu0 0.0
    %249 = vmatpush1.msra.mxu0 %v76
    %250 = vmatprep.subr.mxu0 0.0
    %251 = vmatpush1.msra.mxu0 %v77
    %252 = vmatprep.subr.mxu0 0.0
    %253 = vmatpush1.msra.mxu0 %v78
    %254 = vmatprep.subr.mxu0 0.0
    %255 = vmatpush1.msra.mxu0 %v79
    %256 = vmatprep.subr.mxu0 0.0
    %257 = vmatpush1.msra.mxu0 %v80
    %258 = vmatprep.subr.mxu0 0.0
    %259 = vmatpush1.msra.mxu0 %v81
    %260 = vmatprep.subr.mxu0 0.0
    %261 = vmatpush1.msra.mxu0 0.0
    %262 = vmatprep.subr.mxu0 0.0
    %263 = vmatpush1.msra.mxu0 0.0
    %264 = vmatprep.subr.mxu0 0.0
    %265 = vmatpush1.msra.mxu0 0.0
    %266 = vmatprep.subr.mxu0 0.0
    %267 = vmatpush1.msra.mxu0 0.0
    %268 = vmatprep.subr.mxu0 0.0
    %269 = vmatpush1.msra.mxu0 0.0
    %270 = vmatprep.subr.mxu0 0.0
    %271 = vmatpush1.msra.mxu0 0.0
    %272 = vmatprep.subr.mxu0 0.0
    %273 = vmatpush1.msra.mxu0 0.0
    %274 = vmatprep.subr.mxu0 0.0
    %275 = vmatpush1.msra.mxu0 0.0
    %276 = vmatprep.subr.mxu0 0.0
    %277 = vmatpush1.msra.mxu0 0.0
    %278 = vmatprep.subr.mxu0 0.0
    %279 = vmatpush1.msra.mxu0 0.0
    %280 = vmatprep.subr.mxu0 0.0
    %281 = vmatpush1.msra.mxu0 0.0
    %282 = vmatprep.subr.mxu0 0.0
    %283 = vmatpush1.msra.mxu0 0.0
    %284 = vmatprep.subr.mxu0 0.0
    %285 = vmatpush1.msra.mxu0 0.0
    %286 = vmatprep.subr.mxu0 0.0
    %287 = vmatpush1.msra.mxu0 0.0
    %288 = vmatprep.subr.mxu0 0.0
    %289 = vmatpush1.msra.mxu0 0.0
    %290 = vmatprep.subr.mxu0 0.0
    %291 = vmatpush1.msra.mxu0 0.0
    %292 = vmatprep.mubr.f32.mxu0 0.0
    %293 = vmatmul.mubr.f32.gmra.mrb[0].mxu0 %v227
    %v294 = vpop.f32.mrb[0].mxu0
    %v295 = vadd.f32 0.0, %v294
    %v296 = vpop.f32.mrb[0].mxu0
    %297 = vdwg.mxu0
    %vm298 = vcmask 261120
    %v299 = vsel %vm298, %v18, 0.0
    %300 = vadd.xlane.f32.xlu0 %v299
    %v301 = vpop.xlane.xlu0 %300
    %v302 = vrcp.pop 32.0
    %v303 = vmul.f32 %v301, %v302
    %v304 = vsub.f32 %v18, %v303
    %v305 = vmul.f32 %v304, %v304
    %v306 = vsel %vm298, %v305, 0.0
    %307 = vadd.xlane.f32.xlu0 %v306
    %v308 = vpop.xlane.xlu0 %307
    %v309 = vmul.f32 %v308, %v302
    %v310 = vadd.f32 %v309, 1e-05
    %v311 = vrsqrt.pop %v310
    %v312 = vmul.f32 %v304, %v311
    %v313 = vmul.f32 %v312, %v20
    %v314 = vadd.f32 %v313, %v21
    %v316 = vsel %vm298, %v314, 0
    %318 = vmatprep.subr.mxu0 0.0
    %319 = vmatpush1.msra.mxu0 %v34
    %320 = vmatprep.subr.mxu0 0.0
    %321 = vmatpush1.msra.mxu0 %v35
    %322 = vmatprep.subr.mxu0 0.0
    %323 = vmatpush1.msra.mxu0 %v36
    %324 = vmatprep.subr.mxu0 0.0
    %325 = vmatpush1.msra.mxu0 %v37
    %326 = vmatprep.subr.mxu0 0.0
    %327 = vmatpush1.msra.mxu0 0.0
    %328 = vmatprep.subr.mxu0 0.0
    %329 = vmatpush1.msra.mxu0 0.0
    %330 = vmatprep.subr.mxu0 0.0
    %331 = vmatpush1.msra.mxu0 0.0
    %332 = vmatprep.subr.mxu0 0.0
    %333 = vmatpush1.msra.mxu0 0.0
    %334 = vmatprep.subr.mxu0 0.0
    %335 = vmatpush1.msra.mxu0 0.0
    %336 = vmatprep.subr.mxu0 0.0
    %337 = vmatpush1.msra.mxu0 0.0
    %338 = vmatprep.subr.mxu0 0.0
    %339 = vmatpush1.msra.mxu0 0.0
    %340 = vmatprep.subr.mxu0 0.0
    %341 = vmatpush1.msra.mxu0 0.0
    %342 = vmatprep.subr.mxu0 0.0
    %343 = vmatpush1.msra.mxu0 0.0
    %344 = vmatprep.subr.mxu0 0.0
    %345 = vmatpush1.msra.mxu0 0.0
    %346 = vmatprep.subr.mxu0 0.0
    %347 = vmatpush1.msra.mxu0 0.0
    %348 = vmatprep.subr.mxu0 0.0
    %349 = vmatpush1.msra.mxu0 0.0
    %350 = vmatprep.subr.mxu0 0.0
    %351 = vmatpush1.msra.mxu0 0.0
    %352 = vmatprep.subr.mxu0 0.0
    %353 = vmatpush1.msra.mxu0 0.0
    %354 = vmatprep.subr.mxu0 0.0
    %355 = vmatpush1.msra.mxu0 0.0
    %356 = vmatprep.subr.mxu0 0.0
    %357 = vmatpush1.msra.mxu0 0.0
    %358 = vmatprep.subr.mxu0 0.0
    %359 = vmatpush1.msra.mxu0 0.0
    %360 = vmatprep.subr.mxu0 0.0
    %361 = vmatpush1.msra.mxu0 0.0
    %362 = vmatprep.subr.mxu0 0.0
    %363 = vmatpush1.msra.mxu0 0.0
    %364 = vmatprep.subr.mxu0 0.0
    %365 = vmatpush1.msra.mxu0 0.0
    %366 = vmatprep.subr.mxu0 0.0
    %367 = vmatpush1.msra.mxu0 0.0
    %368 = vmatprep.subr.mxu0 0.0
    %369 = vmatpush1.msra.mxu0 0.0
    %370 = vmatprep.subr.mxu0 0.0
    %371 = vmatpush1.msra.mxu0 0.0
    %372 = vmatprep.subr.mxu0 0.0
    %373 = vmatpush1.msra.mxu0 0.0
    %374 = vmatprep.subr.mxu0 0.0
    %375 = vmatpush1.msra.mxu0 0.0
    %376 = vmatprep.subr.mxu0 0.0
    %377 = vmatpush1.msra.mxu0 0.0
    %378 = vmatprep.subr.mxu0 0.0
    %379 = vmatpush1.msra.mxu0 0.0
    %380 = vmatprep.subr.mxu0 0.0
    %381 = vmatpush1.msra.mxu0 0.0
    %382 = vmatprep.mubr.f32.mxu0 0.0
    %383 = vmatmul.mubr.f32.gmra.mrb[0].mxu0 %v316
    %v384 = vpop.f32.mrb[0].mxu0
    %v385 = vadd.f32 %v24, %v384
    %v386 = vpop.f32.mrb[0].mxu0
    %387 = vdwg.mxu0
    %v388 = vxor.u32 %v385, 2147483648
    %v389 = vmul.f32 %v388, 1.442695
    %v390 = vpow.pop %v389
    %v391 = vadd.f32 %v390, 1.0
    %v392 = vrcp.pop %v391
    %v393 = vmul.f32 1.0, %v392
    %395 = vrot.lane.b32.xlu0 %v385, 96
    %v396 = vpop.permute.xlu0 %395
    %vm397 = vcmask 64512
    %v398 = vsel %vm397, %v385, 0
    %v400 = vsel %vm397, %v396, 0
    %402 = vmatprep.subr.mxu0 0.0
    %403 = vmatpush1.xpose.msra.mxu0 %v400
    %404 = vmatprep.subr.mxu0 0.0
    %405 = vmatpush1.xpose.msra.mxu0 0.0
    %406 = vmatprep.subr.mxu0 0.0
    %407 = vmatpush1.xpose.msra.mxu0 0.0
    %408 = vmatprep.subr.mxu0 0.0
    %409 = vmatpush1.xpose.msra.mxu0 0.0
    %410 = vmatprep.subr.mxu0 0.0
    %411 = vmatpush1.xpose.msra.mxu0 0.0
    %412 = vmatprep.subr.mxu0 0.0
    %413 = vmatpush1.xpose.msra.mxu0 0.0
    %414 = vmatprep.subr.mxu0 0.0
    %415 = vmatpush1.xpose.msra.mxu0 0.0
    %416 = vmatprep.subr.mxu0 0.0
    %417 = vmatpush1.xpose.msra.mxu0 0.0
    %418 = vmatprep.subr.mxu0 0.0
    %419 = vmatpush1.xpose.msra.mxu0 0.0
    %420 = vmatprep.subr.mxu0 0.0
    %421 = vmatpush1.xpose.msra.mxu0 0.0
    %422 = vmatprep.subr.mxu0 0.0
    %423 = vmatpush1.xpose.msra.mxu0 0.0
    %424 = vmatprep.subr.mxu0 0.0
    %425 = vmatpush1.xpose.msra.mxu0 0.0
    %426 = vmatprep.subr.mxu0 0.0
    %427 = vmatpush1.xpose.msra.mxu0 0.0
    %428 = vmatprep.subr.mxu0 0.0
    %429 = vmatpush1.xpose.msra.mxu0 0.0
    %430 = vmatprep.subr.mxu0 0.0
    %431 = vmatpush1.xpose.msra.mxu0 0.0
    %432 = vmatprep.subr.mxu0 0.0
    %433 = vmatpush1.xpose.msra.mxu0 0.0
    %434 = vmatprep.subr.mxu0 0.0
    %435 = vmatpush1.xpose.msra.mxu0 0.0
    %436 = vmatprep.subr.mxu0 0.0
    %437 = vmatpush1.xpose.msra.mxu0 0.0
    %438 = vmatprep.subr.mxu0 0.0
    %439 = vmatpush1.xpose.msra.mxu0 0.0
    %440 = vmatprep.subr.mxu0 0.0
    %441 = vmatpush1.xpose.msra.mxu0 0.0
    %442 = vmatprep.subr.mxu0 0.0
    %443 = vmatpush1.xpose.msra.mxu0 0.0
    %444 = vmatprep.subr.mxu0 0.0
    %445 = vmatpush1.xpose.msra.mxu0 0.0
    %446 = vmatprep.subr.mxu0 0.0
    %447 = vmatpush1.xpose.msra.mxu0 0.0
    %448 = vmatprep.subr.mxu0 0.0
    %449 = vmatpush1.xpose.msra.mxu0 0.0
    %450 = vmatprep.subr.mxu0 0.0
    %451 = vmatpush1.xpose.msra.mxu0 0.0
    %452 = vmatprep.subr.mxu0 0.0
    %453 = vmatpush1.xpose.msra.mxu0 0.0
    %454 = vmatprep.subr.mxu0 0.0
    %455 = vmatpush1.xpose.msra.mxu0 0.0
    %456 = vmatprep.subr.mxu0 0.0
    %457 = vmatpush1.xpose.msra.mxu0 0.0
    %458 = vmatprep.subr.mxu0 0.0
    %459 = vmatpush1.xpose.msra.mxu0 0.0
    %460 = vmatprep.subr.mxu0 0.0
    %461 = vmatpush1.xpose.msra.mxu0 0.0
    %462 = vmatprep.subr.mxu0 0.0
    %463 = vmatpush1.xpose.msra.mxu0 0.0
    %464 = vmatprep.subr.mxu0 0.0
    %465 = vmatpush1.xpose.msra.mxu0 0.0
    %466 = vmatprep.mubr.f32.mxu0 0.0
    %467 = vmatmul.mubr.f32.gmra.mrb[0].mxu0 %v398
    %v468 = vpop.f32.mrb[0].mxu0
    %v469 = vadd.f32 %v295, %v468
    %v470 = vpop.f32.mrb[0].mxu0
    %471 = vdwg.mxu0
    %v472 = vsel %vm397, %v469, -inf
    %473 = vmax.xlane.f32.xlu0 %v472
    %v474 = vpop.xlane.xlu0 %473
    %v475 = vsub.f32 %v469, %v474
    %v476 = vmul.f32 %v475, 1.442695
    %v477 = vpow.pop %v476
    %v478 = vsel %vm397, %v477, 0.0
    %479 = vadd.xlane.f32.xlu0 %v478
    %v480 = vpop.xlane.xlu0 %479
    %v481 = vrcp.pop %v480
    %v482 = vmul.f32 %v477, %v481
    %483 = vrot.lane.b32.xlu0 %v385, 64
    %v484 = vpop.permute.xlu0 %483
    %v487 = vsel %vm397, %v482, 0
    %489 = vmatprep.subr.mxu0 0.0
    %490 = vmatpush1.msra.mxu0 %v484
    %491 = vmatprep.subr.mxu0 0.0
    %492 = vmatpush1.msra.mxu0 0.0
    %493 = vmatprep.subr.mxu0 0.0
    %494 = vmatpush1.msra.mxu0 0.0
    %495 = vmatprep.subr.mxu0 0.0
    %496 = vmatpush1.msra.mxu0 0.0
    %497 = vmatprep.subr.mxu0 0.0
    %498 = vmatpush1.msra.mxu0 0.0
    %499 = vmatprep.subr.mxu0 0.0
    %500 = vmatpush1.msra.mxu0 0.0
    %501 = vmatprep.subr.mxu0 0.0
    %502 = vmatpush1.msra.mxu0 0.0
    %503 = vmatprep.subr.mxu0 0.0
    %504 = vmatpush1.msra.mxu0 0.0
    %505 = vmatprep.subr.mxu0 0.0
    %506 = vmatpush1.msra.mxu0 0.0
    %507 = vmatprep.subr.mxu0 0.0
    %508 = vmatpush1.msra.mxu0 0.0
    %509 = vmatprep.subr.mxu0 0.0
    %510 = vmatpush1.msra.mxu0 0.0
    %511 = vmatprep.subr.mxu0 0.0
    %512 = vmatpush1.msra.mxu0 0.0
    %513 = vmatprep.subr.mxu0 0.0
    %514 = vmatpush1.msra.mxu0 0.0
    %515 = vmatprep.subr.mxu0 0.0
    %516 = vmatpush1.msra.mxu0 0.0
    %517 = vmatprep.subr.mxu0 0.0
    %518 = vmatpush1.msra.mxu0 0.0
    %519 = vmatprep.subr.mxu0 0.0
    %520 = vmatpush1.msra.mxu0 0.0
    %521 = vmatprep.subr.mxu0 0.0
    %522 = vmatpush1.msra.mxu0 0.0
    %523 = vmatprep.subr.mxu0 0.0
    %524 = vmatpush1.msra.mxu0 0.0
    %525 = vmatprep.subr.mxu0 0.0
    %526 = vmatpush1.msra.mxu0 0.0
    %527 = vmatprep.subr.mxu0 0.0
    %528 = vmatpush1.msra.mxu0 0.0
    %529 = vmatprep.subr.mxu0 0.0
    %530 = vmatpush1.msra.mxu0 0.0
    %531 = vmatprep.subr.mxu0 0.0
    %532 = vmatpush1.msra.mxu0 0.0
    %533 = vmatprep.subr.mxu0 0.0
    %534 = vmatpush1.msra.mxu0 0.0
    %535 = vmatprep.subr.mxu0 0.0
    %536 = vmatpush1.msra.mxu0 0.0
    %537 = vmatprep.subr.mxu0 0.0
    %538 = vmatpush1.msra.mxu0 0.0
    %539 = vmatprep.subr.mxu0 0.0
    %540 = vmatpush1.msra.mxu0 0.0
    %541 = vmatprep.subr.mxu0 0.0
    %542 = vmatpush1.msra.mxu0 0.0
    %543 = vmatprep.subr.mxu0 0.0
    %544 = vmatpush1.msra.mxu0 0.0
    %545 = vmatprep.subr.mxu0 0.0
    %546 = vmatpush1.msra.mxu0 0.0
    %547 = vmatprep.subr.mxu0 0.0
    %548 = vmatpush1.msra.mxu0 0.0
    %549 = vmatprep.subr.mxu0 0.0
    %550 = vmatpush1.msra.mxu0 0.0
    %551 = vmatprep.subr.mxu0 0.0
    %552 = vmatpush1.msra.mxu0 0.0
    %553 = vmatprep.mubr.f32.mxu0 0.0
    %554 = vmatmul.mubr.f32.gmra.mrb[0].mxu0 %v487
    %v555 = vpop.f32.mrb[0].mxu0
    %v556 = vadd.f32 0.0, %v555
    %v557 = vpop.f32.mrb[0].mxu0
    %558 = vdwg.mxu0
    %559 = vrot.lane.b32.xlu0 %v385, 120
    %v560 = vpop.permute.xlu0 %559
    %561 = vrot.lane.b32.xlu0 %v385, 88
    %v562 = vpop.permute.xlu0 %561
    %564 = vrot.lane.b32.xlu0 %v295, 120
    %v565 = vpop.permute.xlu0 %564
    %v567 = vsel %vm397, %v560, 0
    %v569 = vsel %vm397, %v562, 0
    %571 = vmatprep.subr.mxu0 0.0
    %572 = vmatpush1.xpose.msra.mxu0 %v569
    %573 = vmatprep.subr.mxu0 0.0
    %574 = vmatpush1.xpose.msra.mxu0 0.0
    %575 = vmatprep.subr.mxu0 0.0
    %576 = vmatpush1.xpose.msra.mxu0 0.0
    %577 = vmatprep.subr.mxu0 0.0
    %578 = vmatpush1.xpose.msra.mxu0 0.0
    %579 = vmatprep.subr.mxu0 0.0
    %580 = vmatpush1.xpose.msra.mxu0 0.0
    %581 = vmatprep.subr.mxu0 0.0
    %582 = vmatpush1.xpose.msra.mxu0 0.0
    %583 = vmatprep.subr.mxu0 0.0
    %584 = vmatpush1.xpose.msra.mxu0 0.0
    %585 = vmatprep.subr.mxu0 0.0
    %586 = vmatpush1.xpose.msra.mxu0 0.0
    %587 = vmatprep.subr.mxu0 0.0
    %588 = vmatpush1.xpose.msra.mxu0 0.0
    %589 = vmatprep.subr.mxu0 0.0
    %590 = vmatpush1.xpose.msra.mxu0 0.0
    %591 = vmatprep.subr.mxu0 0.0
    %592 = vmatpush1.xpose.msra.mxu0 0.0
    %593 = vmatprep.subr.mxu0 0.0
    %594 = vmatpush1.xpose.msra.mxu0 0.0
    %595 = vmatprep.subr.mxu0 0.0
    %596 = vmatpush1.xpose.msra.mxu0 0.0
    %597 = vmatprep.subr.mxu0 0.0
    %598 = vmatpush1.xpose.msra.mxu0 0.0
    %599 = vmatprep.subr.mxu0 0.0
    %600 = vmatpush1.xpose.msra.mxu0 0.0
    %601 = vmatprep.subr.mxu0 0.0
    %602 = vmatpush1.xpose.msra.mxu0 0.0
    %603 = vmatprep.subr.mxu0 0.0
    %604 = vmatpush1.xpose.msra.mxu0 0.0
    %605 = vmatprep.subr.mxu0 0.0
    %606 = vmatpush1.xpose.msra.mxu0 0.0
    %607 = vmatprep.subr.mxu0 0.0
    %608 = vmatpush1.xpose.msra.mxu0 0.0
    %609 = vmatprep.subr.mxu0 0.0
    %610 = vmatpush1.xpose.msra.mxu0 0.0
    %611 = vmatprep.subr.mxu0 0.0
    %612 = vmatpush1.xpose.msra.mxu0 0.0
    %613 = vmatprep.subr.mxu0 0.0
    %614 = vmatpush1.xpose.msra.mxu0 0.0
    %615 = vmatprep.subr.mxu0 0.0
    %616 = vmatpush1.xpose.msra.mxu0 0.0
    %617 = vmatprep.subr.mxu0 0.0
    %618 = vmatpush1.xpose.msra.mxu0 0.0
    %619 = vmatprep.subr.mxu0 0.0
    %620 = vmatpush1.xpose.msra.mxu0 0.0
    %621 = vmatprep.subr.mxu0 0.0
    %622 = vmatpush1.xpose.msra.mxu0 0.0
    %623 = vmatprep.subr.mxu0 0.0
    %624 = vmatpush1.xpose.msra.mxu0 0.0
    %625 = vmatprep.subr.mxu0 0.0
    %626 = vmatpush1.xpose.msra.mxu0 0.0
    %627 = vmatprep.subr.mxu0 0.0
    %628 = vmatpush1.xpose.msra.mxu0 0.0
    %629 = vmatprep.subr.mxu0 0.0
    %630 = vmatpush1.xpose.msra.mxu0 0.0
    %631 = vmatprep.subr.mxu0 0.0
    %632 = vmatpush1.xpose.msra.mxu0 0.0
    %633 = vmatprep.subr.mxu0 0.0
    %634 = vmatpush1.xpose.msra.mxu0 0.0
    %635 = vmatprep.mubr.f32.mxu0 0.0
    %636 = vmatmul.mubr.f32.gmra.mrb[0].mxu0 %v567
    %v637 = vpop.f32.mrb[0].mxu0
    %v638 = vadd.f32 %v565, %v637
    %v639 = vpop.f32.mrb[0].mxu0
    %640 = vdwg.mxu0
    %v641 = vsel %vm397, %v638, -inf
    %642 = vmax.xlane.f32.xlu0 %v641
    %v643 = vpop.xlane.xlu0 %642
    %v644 = vsub.f32 %v638, %v643
    %v645 = vmul.f32 %v644, 1.442695
    %v646 = vpow.pop %v645
    %v647 = vsel %vm397, %v646, 0.0
    %648 = vadd.xlane.f32.xlu0 %v647
    %v649 = vpop.xlane.xlu0 %648
    %v650 = vrcp.pop %v649
    %v651 = vmul.f32 %v646, %v650
    %652 = vrot.lane.b32.xlu0 %v385, 56
    %v653 = vpop.permute.xlu0 %652
    %v656 = vsel %vm397, %v651, 0
    %658 = vmatprep.subr.mxu0 0.0
    %659 = vmatpush1.msra.mxu0 %v653
    %660 = vmatprep.subr.mxu0 0.0
    %661 = vmatpush1.msra.mxu0 0.0
    %662 = vmatprep.subr.mxu0 0.0
    %663 = vmatpush1.msra.mxu0 0.0
    %664 = vmatprep.subr.mxu0 0.0
    %665 = vmatpush1.msra.mxu0 0.0
    %666 = vmatprep.subr.mxu0 0.0
    %667 = vmatpush1.msra.mxu0 0.0
    %668 = vmatprep.subr.mxu0 0.0
    %669 = vmatpush1.msra.mxu0 0.0
    %670 = vmatprep.subr.mxu0 0.0
    %671 = vmatpush1.msra.mxu0 0.0
    %672 = vmatprep.subr.mxu0 0.0
    %673 = vmatpush1.msra.mxu0 0.0
    %674 = vmatprep.subr.mxu0 0.0
    %675 = vmatpush1.msra.mxu0 0.0
    %676 = vmatprep.subr.mxu0 0.0
    %677 = vmatpush1.msra.mxu0 0.0
    %678 = vmatprep.subr.mxu0 0.0
    %679 = vmatpush1.msra.mxu0 0.0
    %680 = vmatprep.subr.mxu0 0.0
    %681 = vmatpush1.msra.mxu0 0.0
    %682 = vmatprep.subr.mxu0 0.0
    %683 = vmatpush1.msra.mxu0 0.0
    %684 = vmatprep.subr.mxu0 0.0
    %685 = vmatpush1.msra.mxu0 0.0
    %686 = vmatprep.subr.mxu0 0.0
    %687 = vmatpush1.msra.mxu0 0.0
    %688 = vmatprep.subr.mxu0 0.0
    %689 = vmatpush1.msra.mxu0 0.0
    %690 = vmatprep.subr.mxu0 0.0
    %691 = vmatpush1.msra.mxu0 0.0
    %692 = vmatprep.subr.mxu0 0.0
    %693 = vmatpush1.msra.mxu0 0.0
    %694 = vmatprep.subr.mxu0 0.0
    %695 = vmatpush1.msra.mxu0 0.0
    %696 = vmatprep.subr.mxu0 0.0
    %697 = vmatpush1.msra.mxu0 0.0
    %698 = vmatprep.subr.mxu0 0.0
    %699 = vmatpush1.msra.mxu0 0.0
    %700 = vmatprep.subr.mxu0 0.0
    %701 = vmatpush1.msra.mxu0 0.0
    %702 = vmatprep.subr.mxu0 0.0
    %703 = vmatpush1.msra.mxu0 0.0
    %704 = vmatprep.subr.mxu0 0.0
    %705 = vmatpush1.msra.mxu0 0.0
    %706 = vmatprep.subr.mxu0 0.0
    %707 = vmatpush1.msra.mxu0 0.0
    %708 = vmatprep.subr.mxu0 0.0
    %709 = vmatpush1.msra.mxu0 0.0
    %710 = vmatprep.subr.mxu0 0.0
    %711 = vmatpush1.msra.mxu0 0.0
    %712 = vmatprep.subr.mxu0 0.0
    %713 = vmatpush1.msra.mxu0 0.0
    %714 = vmatprep.subr.mxu0 0.0
    %715 = vmatpush1.msra.mxu0 0.0
    %716 = vmatprep.subr.mxu0 0.0
    %717 = vmatpush1.msra.mxu0 0.0
    %718 = vmatprep.subr.mxu0 0.0
    %719 = vmatpush1.msra.mxu0 0.0
    %720 = vmatprep.subr.mxu0 0.0
    %721 = vmatpush1.msra.mxu0 0.0
    %722 = vmatprep.mubr.f32.mxu0 0.0
    %723 = vmatmul.mubr.f32.gmra.mrb[0].mxu0 %v656
    %v724 = vpop.f32.mrb[0].mxu0
    %v725 = vadd.f32 0.0, %v724
    %v726 = vpop.f32.mrb[0].mxu0
    %727 = vdwg.mxu0
    %728 = vrot.lane.b32.xlu0 %v385, 112
    %v729 = vpop.permute.xlu0 %728
    %730 = vrot.lane.b32.xlu0 %v385, 80
    %v731 = vpop.permute.xlu0 %730
    %732 = vrot.lane.b32.xlu0 %v295, 112
    %v733 = vpop.permute.xlu0 %732
    %v735 = vsel %vm397, %v729, 0
    %v737 = vsel %vm397, %v731, 0
    %739 = vmatprep.subr.mxu0 0.0
    %740 = vmatpush1.xpose.msra.mxu0 %v737
    %741 = vmatprep.subr.mxu0 0.0
    %742 = vmatpush1.xpose.msra.mxu0 0.0
    %743 = vmatprep.subr.mxu0 0.0
    %744 = vmatpush1.xpose.msra.mxu0 0.0
    %745 = vmatprep.subr.mxu0 0.0
    %746 = vmatpush1.xpose.msra.mxu0 0.0
    %747 = vmatprep.subr.mxu0 0.0
    %748 = vmatpush1.xpose.msra.mxu0 0.0
    %749 = vmatprep.subr.mxu0 0.0
    %750 = vmatpush1.xpose.msra.mxu0 0.0
    %751 = vmatprep.subr.mxu0 0.0
    %752 = vmatpush1.xpose.msra.mxu0 0.0
    %753 = vmatprep.subr.mxu0 0.0
    %754 = vmatpush1.xpose.msra.mxu0 0.0
    %755 = vmatprep.subr.mxu0 0.0
    %756 = vmatpush1.xpose.msra.mxu0 0.0
    %757 = vmatprep.subr.mxu0 0.0
    %758 = vmatpush1.xpose.msra.mxu0 0.0
    %759 = vmatprep.subr.mxu0 0.0
    %760 = vmatpush1.xpose.msra.mxu0 0.0
    %761 = vmatprep.subr.mxu0 0.0
    %762 = vmatpush1.xpose.msra.mxu0 0.0
    %763 = vmatprep.subr.mxu0 0.0
    %764 = vmatpush1.xpose.msra.mxu0 0.0
    %765 = vmatprep.subr.mxu0 0.0
    %766 = vmatpush1.xpose.msra.mxu0 0.0
    %767 = vmatprep.subr.mxu0 0.0
    %768 = vmatpush1.xpose.msra.mxu0 0.0
    %769 = vmatprep.subr.mxu0 0.0
    %770 = vmatpush1.xpose.msra.mxu0 0.0
    %771 = vmatprep.subr.mxu0 0.0
    %772 = vmatpush1.xpose.msra.mxu0 0.0
    %773 = vmatprep.subr.mxu0 0.0
    %774 = vmatpush1.xpose.msra.mxu0 0.0
    %775 = vmatprep.subr.mxu0 0.0
    %776 = vmatpush1.xpose.msra.mxu0 0.0
    %777 = vmatprep.subr.mxu0 0.0
    %778 = vmatpush1.xpose.msra.mxu0 0.0
    %779 = vmatprep.subr.mxu0 0.0
    %780 = vmatpush1.xpose.msra.mxu0 0.0
    %781 = vmatprep.subr.mxu0 0.0
    %782 = vmatpush1.xpose.msra.mxu0 0.0
    %783 = vmatprep.subr.mxu0 0.0
    %784 = vmatpush1.xpose.msra.mxu0 0.0
    %785 = vmatprep.subr.mxu0 0.0
    %786 = vmatpush1.xpose.msra.mxu0 0.0
    %787 = vmatprep.subr.mxu0 0.0
    %788 = vmatpush1.xpose.msra.mxu0 0.0
    %789 = vmatprep.subr.mxu0 0.0
    %790 = vmatpush1.xpose.msra.mxu0 0.0
    %791 = vmatprep.subr.mxu0 0.0
    %792 = vmatpush1.xpose.msra.mxu0 0.0
    %793 = vmatprep.subr.mxu0 0.0
    %794 = vmatpush1.xpose.msra.mxu0 0.0
    %795 = vmatprep.subr.mxu0 0.0
    %796 = vmatpush1.xpose.msra.mxu0 0.0
    %797 = vmatprep.subr.mxu0 0.0
    %798 = vmatpush1.xpose.msra.mxu0 0.0
    %799 = vmatprep.subr.mxu0 0.0
    %800 = vmatpush1.xpose.msra.mxu0 0.0
    %801 = vmatprep.subr.mxu0 0.0
    %802 = vmatpush1.xpose.msra.mxu0 0.0
    %803 = vmatprep.mubr.f32.mxu0 0.0
    %804 = vmatmul.mubr.f32.gmra.mrb[0].mxu0 %v735
    %v805 = vpop.f32.mrb[0].mxu0
    %v806 = vadd.f32 %v733, %v805
    %v807 = vpop.f32.mrb[0].mxu0
    %808 = vdwg.mxu0
    %v809 = vsel %vm397, %v806, -inf
    %810 = vmax.xlane.f32.xlu0 %v809
    %v811 = vpop.xlane.xlu0 %810
    %v812 = vsub.f32 %v806, %v811
    %v813 = vmul.f32 %v812, 1.442695
    %v814 = vpow.pop %v813
    %v815 = vsel %vm397, %v814, 0.0
    %816 = vadd.xlane.f32.xlu0 %v815
    %v817 = vpop.xlane.xlu0 %816
    %v818 = vrcp.pop %v817
    %v819 = vmul.f32 %v814, %v818
    %820 = vrot.lane.b32.xlu0 %v385, 48
    %v821 = vpop.permute.xlu0 %820
    %v824 = vsel %vm397, %v819, 0
    %826 = vmatprep.subr.mxu0 0.0
    %827 = vmatpush1.msra.mxu0 %v821
    %828 = vmatprep.subr.mxu0 0.0
    %829 = vmatpush1.msra.mxu0 0.0
    %830 = vmatprep.subr.mxu0 0.0
    %831 = vmatpush1.msra.mxu0 0.0
    %832 = vmatprep.subr.mxu0 0.0
    %833 = vmatpush1.msra.mxu0 0.0
    %834 = vmatprep.subr.mxu0 0.0
    %835 = vmatpush1.msra.mxu0 0.0
    %836 = vmatprep.subr.mxu0 0.0
    %837 = vmatpush1.msra.mxu0 0.0
    %838 = vmatprep.subr.mxu0 0.0
    %839 = vmatpush1.msra.mxu0 0.0
    %840 = vmatprep.subr.mxu0 0.0
    %841 = vmatpush1.msra.mxu0 0.0
    %842 = vmatprep.subr.mxu0 0.0
    %843 = vmatpush1.msra.mxu0 0.0
    %844 = vmatprep.subr.mxu0 0.0
    %845 = vmatpush1.msra.mxu0 0.0
    %846 = vmatprep.subr.mxu0 0.0
    %847 = vmatpush1.msra.mxu0 0.0
    %848 = vmatprep.subr.mxu0 0.0
    %849 = vmatpush1.msra.mxu0 0.0
    %850 = vmatprep.subr.mxu0 0.0
    %851 = vmatpush1.msra.mxu0 0.0
    %852 = vmatprep.subr.mxu0 0.0
    %853 = vmatpush1.msra.mxu0 0.0
    %854 = vmatprep.subr.mxu0 0.0
    %855 = vmatpush1.msra.mxu0 0.0
    %856 = vmatprep.subr.mxu0 0.0
    %857 = vmatpush1.msra.mxu0 0.0
    %858 = vmatprep.subr.mxu0 0.0
    %859 = vmatpush1.msra.mxu0 0.0
    %860 = vmatprep.subr.mxu0 0.0
    %861 = vmatpush1.msra.mxu0 0.0
    %862 = vmatprep.subr.mxu0 0.0
    %863 = vmatpush1.msra.mxu0 0.0
    %864 = vmatprep.subr.mxu0 0.0
    %865 = vmatpush1.msra.mxu0 0.0
    %866 = vmatprep.subr.mxu0 0.0
    %867 = vmatpush1.msra.mxu0 0.0
    %868 = vmatprep.subr.mxu0 0.0
    %869 = vmatpush1.msra.mxu0 0.0
    %870 = vmatprep.subr.mxu0 0.0
    %871 = vmatpush1.msra.mxu0 0.0
    %872 = vmatprep.subr.mxu0 0.0
    %873 = vmatpush1.msra.mxu0 0.0
    %874 = vmatprep.subr.mxu0 0.0
    %875 = vmatpush1.msra.mxu0 0.0
    %876 = vmatprep.subr.mxu0 0.0
    %877 = vmatpush1.msra.mxu0 0.0
    %878 = vmatprep.subr.mxu0 0.0
    %879 = vmatpush1.msra.mxu0 0.0
    %880 = vmatprep.subr.mxu0 0.0
    %881 = vmatpush1.msra.mxu0 0.0
    %882 = vmatprep.subr.mxu0 0.0
    %883 = vmatpush1.msra.mxu0 0.0
    %884 = vmatprep.subr.mxu0 0.0
    %885 = vmatpush1.msra.mxu0 0.0
    %886 = vmatprep.subr.mxu0 0.0
    %887 = vmatpush1.msra.mxu0 0.0
    %888 = vmatprep.subr.mxu0 0.0
    %889 = vmatpush1.msra.mxu0 0.0
    %890 = vmatprep.mubr.f32.mxu0 0.0
    %891 = vmatmul.mubr.f32.gmra.mrb[0].mxu0 %v824
    %v892 = vpop.f32.mrb[0].mxu0
    %v893 = vadd.f32 0.0, %v892
    %v894 = vpop.f32.mrb[0].mxu0
    %895 = vdwg.mxu0
    %896 = vrot.lane.b32.xlu0 %v385, 104
    %v897 = vpop.permute.xlu0 %896
    %898 = vrot.lane.b32.xlu0 %v385, 72
    %v899 = vpop.permute.xlu0 %898
    %900 = vrot.lane.b32.xlu0 %v295, 104
    %v901 = vpop.permute.xlu0 %900
    %v903 = vsel %vm397, %v897, 0
    %v905 = vsel %vm397, %v899, 0
    %907 = vmatprep.subr.mxu0 0.0
    %908 = vmatpush1.xpose.msra.mxu0 %v905
    %909 = vmatprep.subr.mxu0 0.0
    %910 = vmatpush1.xpose.msra.mxu0 0.0
    %911 = vmatprep.subr.mxu0 0.0
    %912 = vmatpush1.xpose.msra.mxu0 0.0
    %913 = vmatprep.subr.mxu0 0.0
    %914 = vmatpush1.xpose.msra.mxu0 0.0
    %915 = vmatprep.subr.mxu0 0.0
    %916 = vmatpush1.xpose.msra.mxu0 0.0
    %917 = vmatprep.subr.mxu0 0.0
    %918 = vmatpush1.xpose.msra.mxu0 0.0
    %919 = vmatprep.subr.mxu0 0.0
    %920 = vmatpush1.xpose.msra.mxu0 0.0
    %921 = vmatprep.subr.mxu0 0.0
    %922 = vmatpush1.xpose.msra.mxu0 0.0
    %923 = vmatprep.subr.mxu0 0.0
    %924 = vmatpush1.xpose.msra.mxu0 0.0
    %925 = vmatprep.subr.mxu0 0.0
    %926 = vmatpush1.xpose.msra.mxu0 0.0
    %927 = vmatprep.subr.mxu0 0.0
    %928 = vmatpush1.xpose.msra.mxu0 0.0
    %929 = vmatprep.subr.mxu0 0.0
    %930 = vmatpush1.xpose.msra.mxu0 0.0
    %931 = vmatprep.subr.mxu0 0.0
    %932 = vmatpush1.xpose.msra.mxu0 0.0
    %933 = vmatprep.subr.mxu0 0.0
    %934 = vmatpush1.xpose.msra.mxu0 0.0
    %935 = vmatprep.subr.mxu0 0.0
    %936 = vmatpush1.xpose.msra.mxu0 0.0
    %937 = vmatprep.subr.mxu0 0.0
    %938 = vmatpush1.xpose.msra.mxu0 0.0
    %939 = vmatprep.subr.mxu0 0.0
    %940 = vmatpush1.xpose.msra.mxu0 0.0
    %941 = vmatprep.subr.mxu0 0.0
    %942 = vmatpush1.xpose.msra.mxu0 0.0
    %943 = vmatprep.subr.mxu0 0.0
    %944 = vmatpush1.xpose.msra.mxu0 0.0
    %945 = vmatprep.subr.mxu0 0.0
    %946 = vmatpush1.xpose.msra.mxu0 0.0
    %947 = vmatprep.subr.mxu0 0.0
    %948 = vmatpush1.xpose.msra.mxu0 0.0
    %949 = vmatprep.subr.mxu0 0.0
    %950 = vmatpush1.xpose.msra.mxu0 0.0
    %951 = vmatprep.subr.mxu0 0.0
    %952 = vmatpush1.xpose.msra.mxu0 0.0
    %953 = vmatprep.subr.mxu0 0.0
    %954 = vmatpush1.xpose.msra.mxu0 0.0
    %955 = vmatprep.subr.mxu0 0.0
    %956 = vmatpush1.xpose.msra.mxu0 0.0
    %957 = vmatprep.subr.mxu0 0.0
    %958 = vmatpush1.xpose.msra.mxu0 0.0
    %959 = vmatprep.subr.mxu0 0.0
    %960 = vmatpush1.xpose.msra.mxu0 0.0
    %961 = vmatprep.subr.mxu0 0.0
    %962 = vmatpush1.xpose.msra.mxu0 0.0
    %963 = vmatprep.subr.mxu0 0.0
    %964 = vmatpush1.xpose.msra.mxu0 0.0
    %965 = vmatprep.subr.mxu0 0.0
    %966 = vmatpush1.xpose.msra.mxu0 0.0
    %967 = vmatprep.subr.mxu0 0.0
    %968 = vmatpush1.xpose.msra.mxu0 0.0
    %969 = vmatprep.subr.mxu0 0.0
    %970 = vmatpush1.xpose.msra.mxu0 0.0
    %971 = vmatprep.mubr.f32.mxu0 0.0
    %972 = vmatmul.mubr.f32.gmra.mrb[0].mxu0 %v903
    %v973 = vpop.f32.mrb[0].mxu0
    %v974 = vadd.f32 %v901, %v973
    %v975 = vpop.f32.mrb[0].mxu0
    %976 = vdwg.mxu0
    %v977 = vsel %vm397, %v974, -inf
    %978 = vmax.xlane.f32.xlu0 %v977
    %v979 = vpop.xlane.xlu0 %978
    %v980 = vsub.f32 %v974, %v979
    %v981 = vmul.f32 %v980, 1.442695
    %v982 = vpow.pop %v981
    %v983 = vsel %vm397, %v982, 0.0
    %984 = vadd.xlane.f32.xlu0 %v983
    %v985 = vpop.xlane.xlu0 %984
    %v986 = vrcp.pop %v985
    %v987 = vmul.f32 %v982, %v986
    %988 = vrot.lane.b32.xlu0 %v385, 40
    %v989 = vpop.permute.xlu0 %988
    %v992 = vsel %vm397, %v987, 0
    %994 = vmatprep.subr.mxu0 0.0
    %995 = vmatpush1.msra.mxu0 %v989
    %996 = vmatprep.subr.mxu0 0.0
    %997 = vmatpush1.msra.mxu0 0.0
    %998 = vmatprep.subr.mxu0 0.0
    %999 = vmatpush1.msra.mxu0 0.0
    %1000 = vmatprep.subr.mxu0 0.0
    %1001 = vmatpush1.msra.mxu0 0.0
    %1002 = vmatprep.subr.mxu0 0.0
    %1003 = vmatpush1.msra.mxu0 0.0
    %1004 = vmatprep.subr.mxu0 0.0
    %1005 = vmatpush1.msra.mxu0 0.0
    %1006 = vmatprep.subr.mxu0 0.0
    %1007 = vmatpush1.msra.mxu0 0.0
    %1008 = vmatprep.subr.mxu0 0.0
    %1009 = vmatpush1.msra.mxu0 0.0
    %1010 = vmatprep.subr.mxu0 0.0
    %1011 = vmatpush1.msra.mxu0 0.0
    %1012 = vmatprep.subr.mxu0 0.0
    %1013 = vmatpush1.msra.mxu0 0.0
    %1014 = vmatprep.subr.mxu0 0.0
    %1015 = vmatpush1.msra.mxu0 0.0
    %1016 = vmatprep.subr.mxu0 0.0
    %1017 = vmatpush1.msra.mxu0 0.0
    %1018 = vmatprep.subr.mxu0 0.0
    %1019 = vmatpush1.msra.mxu0 0.0
    %1020 = vmatprep.subr.mxu0 0.0
    %1021 = vmatpush1.msra.mxu0 0.0
    %1022 = vmatprep.subr.mxu0 0.0
    %1023 = vmatpush1.msra.mxu0 0.0
    %1024 = vmatprep.subr.mxu0 0.0
    %1025 = vmatpush1.msra.mxu0 0.0
    %1026 = vmatprep.subr.mxu0 0.0
    %1027 = vmatpush1.msra.mxu0 0.0
    %1028 = vmatprep.subr.mxu0 0.0
    %1029 = vmatpush1.msra.mxu0 0.0
    %1030 = vmatprep.subr.mxu0 0.0
    %1031 = vmatpush1.msra.mxu0 0.0
    %1032 = vmatprep.subr.mxu0 0.0
    %1033 = vmatpush1.msra.mxu0 0.0
    %1034 = vmatprep.subr.mxu0 0.0
    %1035 = vmatpush1.msra.mxu0 0.0
    %1036 = vmatprep.subr.mxu0 0.0
    %1037 = vmatpush1.msra.mxu0 0.0
    %1038 = vmatprep.subr.mxu0 0.0
    %1039 = vmatpush1.msra.mxu0 0.0
    %1040 = vmatprep.subr.mxu0 0.0
    %1041 = vmatpush1.msra.mxu0 0.0
    %1042 = vmatprep.subr.mxu0 0.0
    %1043 = vmatpush1.msra.mxu0 0.0
    %1044 = vmatprep.subr.mxu0 0.0
    %1045 = vmatpush1.msra.mxu0 0.0
    %1046 = vmatprep.subr.mxu0 0.0
    %1047 = vmatpush1.msra.mxu0 0.0
    %1048 = vmatprep.subr.mxu0 0.0
    %1049 = vmatpush1.msra.mxu0 0.0
    %1050 = vmatprep.subr.mxu0 0.0
    %1051 = vmatpush1.msra.mxu0 0.0
    %1052 = vmatprep.subr.mxu0 0.0
    %1053 = vmatpush1.msra.mxu0 0.0
    %1054 = vmatprep.subr.mxu0 0.0
    %1055 = vmatpush1.msra.mxu0 0.0
    %1056 = vmatprep.subr.mxu0 0.0
    %1057 = vmatpush1.msra.mxu0 0.0
    %1058 = vmatprep.mubr.f32.mxu0 0.0
    %1059 = vmatmul.mubr.f32.gmra.mrb[0].mxu0 %v992
    %v1060 = vpop.f32.mrb[0].mxu0
    %v1061 = vadd.f32 0.0, %v1060
    %v1062 = vpop.f32.mrb[0].mxu0
    %1063 = vdwg.mxu0
    %1065 = vrot.lane.b32.xlu0 %v725, 8
    %v1066 = vpop.permute.xlu0 %1065
    %1069 = vrot.lane.b32.xlu0 %v893, 16
    %v1070 = vpop.permute.xlu0 %1069
    %1073 = vrot.lane.b32.xlu0 %v1061, 24
    %v1074 = vpop.permute.xlu0 %1073
    %v1076 = vsel %vm397, %v556, %v1066
    %vm1077 = vcmask 130048
    %v1078 = vsel %vm1077, %v1076, %v1070
    %vm1079 = vcmask 195584
    %v1080 = vsel %vm1079, %v1078, %v1074
    %1082 = vrot.lane.b32.xlu0 %v393, 32
    %v1083 = vpop.permute.xlu0 %1082
    %v1085 = vmul.f32 %v1080, %v1083
    %v1087 = vsel %vm298, %v1085, 0
    %1089 = vmatprep.subr.mxu0 0.0
    %1090 = vmatpush1.msra.mxu0 %v46
    %1091 = vmatprep.subr.mxu0 0.0
    %1092 = vmatpush1.msra.mxu0 %v47
    %1093 = vmatprep.subr.mxu0 0.0
    %1094 = vmatpush1.msra.mxu0 %v48
    %1095 = vmatprep.subr.mxu0 0.0
    %1096 = vmatpush1.msra.mxu0 %v49
    %1097 = vmatprep.subr.mxu0 0.0
    %1098 = vmatpush1.msra.mxu0 0.0
    %1099 = vmatprep.subr.mxu0 0.0
    %1100 = vmatpush1.msra.mxu0 0.0
    %1101 = vmatprep.subr.mxu0 0.0
    %1102 = vmatpush1.msra.mxu0 0.0
    %1103 = vmatprep.subr.mxu0 0.0
    %1104 = vmatpush1.msra.mxu0 0.0
    %1105 = vmatprep.subr.mxu0 0.0
    %1106 = vmatpush1.msra.mxu0 0.0
    %1107 = vmatprep.subr.mxu0 0.0
    %1108 = vmatpush1.msra.mxu0 0.0
    %1109 = vmatprep.subr.mxu0 0.0
    %1110 = vmatpush1.msra.mxu0 0.0
    %1111 = vmatprep.subr.mxu0 0.0
    %1112 = vmatpush1.msra.mxu0 0.0
    %1113 = vmatprep.subr.mxu0 0.0
    %1114 = vmatpush1.msra.mxu0 0.0
    %1115 = vmatprep.subr.mxu0 0.0
    %1116 = vmatpush1.msra.mxu0 0.0
    %1117 = vmatprep.subr.mxu0 0.0
    %1118 = vmatpush1.msra.mxu0 0.0
    %1119 = vmatprep.subr.mxu0 0.0
    %1120 = vmatpush1.msra.mxu0 0.0
    %1121 = vmatprep.subr.mxu0 0.0
    %1122 = vmatpush1.msra.mxu0 0.0
    %1123 = vmatprep.subr.mxu0 0.0
    %1124 = vmatpush1.msra.mxu0 0.0
    %1125 = vmatprep.subr.mxu0 0.0
    %1126 = vmatpush1.msra.mxu0 0.0
    %1127 = vmatprep.subr.mxu0 0.0
    %1128 = vmatpush1.msra.mxu0 0.0
    %1129 = vmatprep.subr.mxu0 0.0
    %1130 = vmatpush1.msra.mxu0 0.0
    %1131 = vmatprep.subr.mxu0 0.0
    %1132 = vmatpush1.msra.mxu0 0.0
    %1133 = vmatprep.subr.mxu0 0.0
    %1134 = vmatpush1.msra.mxu0 0.0
    %1135 = vmatprep.subr.mxu0 0.0
    %1136 = vmatpush1.msra.mxu0 0.0
    %1137 = vmatprep.subr.mxu0 0.0
    %1138 = vmatpush1.msra.mxu0 0.0
    %1139 = vmatprep.subr.mxu0 0.0
    %1140 = vmatpush1.msra.mxu0 0.0
    %1141 = vmatprep.subr.mxu0 0.0
    %1142 = vmatpush1.msra.mxu0 0.0
    %1143 = vmatprep.subr.mxu0 0.0
    %1144 = vmatpush1.msra.mxu0 0.0
    %1145 = vmatprep.subr.mxu0 0.0
    %1146 = vmatpush1.msra.mxu0 0.0
    %1147 = vmatprep.subr.mxu0 0.0
    %1148 = vmatpush1.msra.mxu0 0.0
    %1149 = vmatprep.subr.mxu0 0.0
    %1150 = vmatpush1.msra.mxu0 0.0
    %1151 = vmatprep.subr.mxu0 0.0
    %1152 = vmatpush1.msra.mxu0 0.0
    %1153 = vmatprep.mubr.f32.mxu0 0.0
    %1154 = vmatmul.mubr.f32.gmra.mrb[0].mxu0 %v1087
    %v1155 = vpop.f32.mrb[0].mxu0
    %v1156 = vadd.f32 %v25, %v1155
    %v1157 = vpop.f32.mrb[0].mxu0
    %1158 = vdwg.mxu0
    %v1159 = vadd.f32 %v18, %v1156
    %v1160 = vsel %vm298, %v1159, 0.0
    %1161 = vadd.xlane.f32.xlu0 %v1160
    %v1162 = vpop.xlane.xlu0 %1161
    %v1163 = vmul.f32 %v1162, %v302
    %v1164 = vsub.f32 %v1159, %v1163
    %v1165 = vmul.f32 %v1164, %v1164
    %v1166 = vsel %vm298, %v1165, 0.0
    %1167 = vadd.xlane.f32.xlu0 %v1166
    %v1168 = vpop.xlane.xlu0 %1167
    %v1169 = vmul.f32 %v1168, %v302
    %v1170 = vadd.f32 %v1169, 1e-05
    %v1171 = vrsqrt.pop %v1170
    %v1172 = vmul.f32 %v1164, %v1171
    %v1173 = vmul.f32 %v1172, %v26
    %v1174 = vadd.f32 %v1173, %v27
    %v1176 = vsel %vm298, %v1174, 0
    %1178 = vmatprep.subr.mxu0 0.0
    %1179 = vmatpush1.msra.mxu0 %v38
    %1180 = vmatprep.subr.mxu0 0.0
    %1181 = vmatpush1.msra.mxu0 %v39
    %1182 = vmatprep.subr.mxu0 0.0
    %1183 = vmatpush1.msra.mxu0 %v40
    %1184 = vmatprep.subr.mxu0 0.0
    %1185 = vmatpush1.msra.mxu0 %v41
    %1186 = vmatprep.subr.mxu0 0.0
    %1187 = vmatpush1.msra.mxu0 0.0
    %1188 = vmatprep.subr.mxu0 0.0
    %1189 = vmatpush1.msra.mxu0 0.0
    %1190 = vmatprep.subr.mxu0 0.0
    %1191 = vmatpush1.msra.mxu0 0.0
    %1192 = vmatprep.subr.mxu0 0.0
    %1193 = vmatpush1.msra.mxu0 0.0
    %1194 = vmatprep.subr.mxu0 0.0
    %1195 = vmatpush1.msra.mxu0 0.0
    %1196 = vmatprep.subr.mxu0 0.0
    %1197 = vmatpush1.msra.mxu0 0.0
    %1198 = vmatprep.subr.mxu0 0.0
    %1199 = vmatpush1.msra.mxu0 0.0
    %1200 = vmatprep.subr.mxu0 0.0
    %1201 = vmatpush1.msra.mxu0 0.0
    %1202 = vmatprep.subr.mxu0 0.0
    %1203 = vmatpush1.msra.mxu0 0.0
    %1204 = vmatprep.subr.mxu0 0.0
    %1205 = vmatpush1.msra.mxu0 0.0
    %1206 = vmatprep.subr.mxu0 0.0
    %1207 = vmatpush1.msra.mxu0 0.0
    %1208 = vmatprep.subr.mxu0 0.0
    %1209 = vmatpush1.msra.mxu0 0.0
    %1210 = vmatprep.subr.mxu0 0.0
    %1211 = vmatpush1.msra.mxu0 0.0
    %1212 = vmatprep.subr.mxu0 0.0
    %1213 = vmatpush1.msra.mxu0 0.0
    %1214 = vmatprep.subr.mxu0 0.0
    %1215 = vmatpush1.msra.mxu0 0.0
    %1216 = vmatprep.subr.mxu0 0.0
    %1217 = vmatpush1.msra.mxu0 0.0
    %1218 = vmatprep.subr.mxu0 0.0
    %1219 = vmatpush1.msra.mxu0 0.0
    %1220 = vmatprep.subr.mxu0 0.0
    %1221 = vmatpush1.msra.mxu0 0.0
    %1222 = vmatprep.subr.mxu0 0.0
    %1223 = vmatpush1.msra.mxu0 0.0
    %1224 = vmatprep.subr.mxu0 0.0
    %1225 = vmatpush1.msra.mxu0 0.0
    %1226 = vmatprep.subr.mxu0 0.0
    %1227 = vmatpush1.msra.mxu0 0.0
    %1228 = vmatprep.subr.mxu0 0.0
    %1229 = vmatpush1.msra.mxu0 0.0
    %1230 = vmatprep.subr.mxu0 0.0
    %1231 = vmatpush1.msra.mxu0 0.0
    %1232 = vmatprep.subr.mxu0 0.0
    %1233 = vmatpush1.msra.mxu0 0.0
    %1234 = vmatprep.subr.mxu0 0.0
    %1235 = vmatpush1.msra.mxu0 0.0
    %1236 = vmatprep.subr.mxu0 0.0
    %1237 = vmatpush1.msra.mxu0 0.0
    %1238 = vmatprep.subr.mxu0 0.0
    %1239 = vmatpush1.msra.mxu0 0.0
    %1240 = vmatprep.subr.mxu0 0.0
    %1241 = vmatpush1.msra.mxu0 0.0
    %1242 = vmatprep.mubr.f32.mxu0 0.0
    %1243 = vmatmul.mubr.f32.gmra.mrb[0].mxu0 %v1176
    %v1244 = vpop.f32.mrb[0].mxu0
    %v1245 = vadd.f32 %v28, %v1244
    %v1246 = vpop.f32.mrb[0].mxu0
    %1247 = vdwg.mxu0
    %v1248 = vxor.u32 %v1245, 2147483648
    %v1249 = vmul.f32 %v1248, 1.442695
    %v1250 = vpow.pop %v1249
    %v1251 = vadd.f32 %v1250, 1.0
    %v1252 = vrcp.pop %v1251
    %v1253 = vmul.f32 1.0, %v1252
    %1255 = vrot.lane.b32.xlu0 %v1245, 96
    %v1256 = vpop.permute.xlu0 %1255
    %v1257 = vsel %vm397, %v1245, 0
    %v1259 = vsel %vm397, %v1256, 0
    %1261 = vmatprep.subr.mxu0 0.0
    %1262 = vmatpush1.xpose.msra.mxu0 %v1259
    %1263 = vmatprep.subr.mxu0 0.0
    %1264 = vmatpush1.xpose.msra.mxu0 0.0
    %1265 = vmatprep.subr.mxu0 0.0
    %1266 = vmatpush1.xpose.msra.mxu0 0.0
    %1267 = vmatprep.subr.mxu0 0.0
    %1268 = vmatpush1.xpose.msra.mxu0 0.0
    %1269 = vmatprep.subr.mxu0 0.0
    %1270 = vmatpush1.xpose.msra.mxu0 0.0
    %1271 = vmatprep.subr.mxu0 0.0
    %1272 = vmatpush1.xpose.msra.mxu0 0.0
    %1273 = vmatprep.subr.mxu0 0.0
    %1274 = vmatpush1.xpose.msra.mxu0 0.0
    %1275 = vmatprep.subr.mxu0 0.0
    %1276 = vmatpush1.xpose.msra.mxu0 0.0
    %1277 = vmatprep.subr.mxu0 0.0
    %1278 = vmatpush1.xpose.msra.mxu0 0.0
    %1279 = vmatprep.subr.mxu0 0.0
    %1280 = vmatpush1.xpose.msra.mxu0 0.0
    %1281 = vmatprep.subr.mxu0 0.0
    %1282 = vmatpush1.xpose.msra.mxu0 0.0
    %1283 = vmatprep.subr.mxu0 0.0
    %1284 = vmatpush1.xpose.msra.mxu0 0.0
    %1285 = vmatprep.subr.mxu0 0.0
    %1286 = vmatpush1.xpose.msra.mxu0 0.0
    %1287 = vmatprep.subr.mxu0 0.0
    %1288 = vmatpush1.xpose.msra.mxu0 0.0
    %1289 = vmatprep.subr.mxu0 0.0
    %1290 = vmatpush1.xpose.msra.mxu0 0.0
    %1291 = vmatprep.subr.mxu0 0.0
    %1292 = vmatpush1.xpose.msra.mxu0 0.0
    %1293 = vmatprep.subr.mxu0 0.0
    %1294 = vmatpush1.xpose.msra.mxu0 0.0
    %1295 = vmatprep.subr.mxu0 0.0
    %1296 = vmatpush1.xpose.msra.mxu0 0.0
    %1297 = vmatprep.subr.mxu0 0.0
    %1298 = vmatpush1.xpose.msra.mxu0 0.0
    %1299 = vmatprep.subr.mxu0 0.0
    %1300 = vmatpush1.xpose.msra.mxu0 0.0
    %1301 = vmatprep.subr.mxu0 0.0
    %1302 = vmatpush1.xpose.msra.mxu0 0.0
    %1303 = vmatprep.subr.mxu0 0.0
    %1304 = vmatpush1.xpose.msra.mxu0 0.0
    %1305 = vmatprep.subr.mxu0 0.0
    %1306 = vmatpush1.xpose.msra.mxu0 0.0
    %1307 = vmatprep.subr.mxu0 0.0
    %1308 = vmatpush1.xpose.msra.mxu0 0.0
    %1309 = vmatprep.subr.mxu0 0.0
    %1310 = vmatpush1.xpose.msra.mxu0 0.0
    %1311 = vmatprep.subr.mxu0 0.0
    %1312 = vmatpush1.xpose.msra.mxu0 0.0
    %1313 = vmatprep.subr.mxu0 0.0
    %1314 = vmatpush1.xpose.msra.mxu0 0.0
    %1315 = vmatprep.subr.mxu0 0.0
    %1316 = vmatpush1.xpose.msra.mxu0 0.0
    %1317 = vmatprep.subr.mxu0 0.0
    %1318 = vmatpush1.xpose.msra.mxu0 0.0
    %1319 = vmatprep.subr.mxu0 0.0
    %1320 = vmatpush1.xpose.msra.mxu0 0.0
    %1321 = vmatprep.subr.mxu0 0.0
    %1322 = vmatpush1.xpose.msra.mxu0 0.0
    %1323 = vmatprep.subr.mxu0 0.0
    %1324 = vmatpush1.xpose.msra.mxu0 0.0
    %1325 = vmatprep.mubr.f32.mxu0 0.0
    %1326 = vmatmul.mubr.f32.gmra.mrb[0].mxu0 %v1257
    %v1327 = vpop.f32.mrb[0].mxu0
    %v1328 = vadd.f32 0.0, %v1327
    %v1329 = vpop.f32.mrb[0].mxu0
    %1330 = vdwg.mxu0
    %v1331 = vsel %vm397, %v1328, -inf
    %1332 = vmax.xlane.f32.xlu0 %v1331
    %v1333 = vpop.xlane.xlu0 %1332
    %v1334 = vsub.f32 %v1328, %v1333
    %v1335 = vmul.f32 %v1334, 1.442695
    %v1336 = vpow.pop %v1335
    %v1337 = vsel %vm397, %v1336, 0.0
    %1338 = vadd.xlane.f32.xlu0 %v1337
    %v1339 = vpop.xlane.xlu0 %1338
    %v1340 = vrcp.pop %v1339
    %v1341 = vmul.f32 %v1336, %v1340
    %1342 = vrot.lane.b32.xlu0 %v1245, 64
    %v1343 = vpop.permute.xlu0 %1342
    %v1346 = vsel %vm397, %v1341, 0
    %1348 = vmatprep.subr.mxu0 0.0
    %1349 = vmatpush1.msra.mxu0 %v1343
    %1350 = vmatprep.subr.mxu0 0.0
    %1351 = vmatpush1.msra.mxu0 0.0
    %1352 = vmatprep.subr.mxu0 0.0
    %1353 = vmatpush1.msra.mxu0 0.0
    %1354 = vmatprep.subr.mxu0 0.0
    %1355 = vmatpush1.msra.mxu0 0.0
    %1356 = vmatprep.subr.mxu0 0.0
    %1357 = vmatpush1.msra.mxu0 0.0
    %1358 = vmatprep.subr.mxu0 0.0
    %1359 = vmatpush1.msra.mxu0 0.0
    %1360 = vmatprep.subr.mxu0 0.0
    %1361 = vmatpush1.msra.mxu0 0.0
    %1362 = vmatprep.subr.mxu0 0.0
    %1363 = vmatpush1.msra.mxu0 0.0
    %1364 = vmatprep.subr.mxu0 0.0
    %1365 = vmatpush1.msra.mxu0 0.0
    %1366 = vmatprep.subr.mxu0 0.0
    %1367 = vmatpush1.msra.mxu0 0.0
    %1368 = vmatprep.subr.mxu0 0.0
    %1369 = vmatpush1.msra.mxu0 0.0
    %1370 = vmatprep.subr.mxu0 0.0
    %1371 = vmatpush1.msra.mxu0 0.0
    %1372 = vmatprep.subr.mxu0 0.0
    %1373 = vmatpush1.msra.mxu0 0.0
    %1374 = vmatprep.subr.mxu0 0.0
    %1375 = vmatpush1.msra.mxu0 0.0
    %1376 = vmatprep.subr.mxu0 0.0
    %1377 = vmatpush1.msra.mxu0 0.0
    %1378 = vmatprep.subr.mxu0 0.0
    %1379 = vmatpush1.msra.mxu0 0.0
    %1380 = vmatprep.subr.mxu0 0.0
    %1381 = vmatpush1.msra.mxu0 0.0
    %1382 = vmatprep.subr.mxu0 0.0
    %1383 = vmatpush1.msra.mxu0 0.0
    %1384 = vmatprep.subr.mxu0 0.0
    %1385 = vmatpush1.msra.mxu0 0.0
    %1386 = vmatprep.subr.mxu0 0.0
    %1387 = vmatpush1.msra.mxu0 0.0
    %1388 = vmatprep.subr.mxu0 0.0
    %1389 = vmatpush1.msra.mxu0 0.0
    %1390 = vmatprep.subr.mxu0 0.0
    %1391 = vmatpush1.msra.mxu0 0.0
    %1392 = vmatprep.subr.mxu0 0.0
    %1393 = vmatpush1.msra.mxu0 0.0
    %1394 = vmatprep.subr.mxu0 0.0
    %1395 = vmatpush1.msra.mxu0 0.0
    %1396 = vmatprep.subr.mxu0 0.0
    %1397 = vmatpush1.msra.mxu0 0.0
    %1398 = vmatprep.subr.mxu0 0.0
    %1399 = vmatpush1.msra.mxu0 0.0
    %1400 = vmatprep.subr.mxu0 0.0
    %1401 = vmatpush1.msra.mxu0 0.0
    %1402 = vmatprep.subr.mxu0 0.0
    %1403 = vmatpush1.msra.mxu0 0.0
    %1404 = vmatprep.subr.mxu0 0.0
    %1405 = vmatpush1.msra.mxu0 0.0
    %1406 = vmatprep.subr.mxu0 0.0
    %1407 = vmatpush1.msra.mxu0 0.0
    %1408 = vmatprep.subr.mxu0 0.0
    %1409 = vmatpush1.msra.mxu0 0.0
    %1410 = vmatprep.subr.mxu0 0.0
    %1411 = vmatpush1.msra.mxu0 0.0
    %1412 = vmatprep.mubr.f32.mxu0 0.0
    %1413 = vmatmul.mubr.f32.gmra.mrb[0].mxu0 %v1346
    %v1414 = vpop.f32.mrb[0].mxu0
    %v1415 = vadd.f32 0.0, %v1414
    %v1416 = vpop.f32.mrb[0].mxu0
    %1417 = vdwg.mxu0
    %1418 = vrot.lane.b32.xlu0 %v1245, 120
    %v1419 = vpop.permute.xlu0 %1418
    %1420 = vrot.lane.b32.xlu0 %v1245, 88
    %v1421 = vpop.permute.xlu0 %1420
    %v1422 = vsel %vm397, %v1419, 0
    %v1424 = vsel %vm397, %v1421, 0
    %1426 = vmatprep.subr.mxu0 0.0
    %1427 = vmatpush1.xpose.msra.mxu0 %v1424
    %1428 = vmatprep.subr.mxu0 0.0
    %1429 = vmatpush1.xpose.msra.mxu0 0.0
    %1430 = vmatprep.subr.mxu0 0.0
    %1431 = vmatpush1.xpose.msra.mxu0 0.0
    %1432 = vmatprep.subr.mxu0 0.0
    %1433 = vmatpush1.xpose.msra.mxu0 0.0
    %1434 = vmatprep.subr.mxu0 0.0
    %1435 = vmatpush1.xpose.msra.mxu0 0.0
    %1436 = vmatprep.subr.mxu0 0.0
    %1437 = vmatpush1.xpose.msra.mxu0 0.0
    %1438 = vmatprep.subr.mxu0 0.0
    %1439 = vmatpush1.xpose.msra.mxu0 0.0
    %1440 = vmatprep.subr.mxu0 0.0
    %1441 = vmatpush1.xpose.msra.mxu0 0.0
    %1442 = vmatprep.subr.mxu0 0.0
    %1443 = vmatpush1.xpose.msra.mxu0 0.0
    %1444 = vmatprep.subr.mxu0 0.0
    %1445 = vmatpush1.xpose.msra.mxu0 0.0
    %1446 = vmatprep.subr.mxu0 0.0
    %1447 = vmatpush1.xpose.msra.mxu0 0.0
    %1448 = vmatprep.subr.mxu0 0.0
    %1449 = vmatpush1.xpose.msra.mxu0 0.0
    %1450 = vmatprep.subr.mxu0 0.0
    %1451 = vmatpush1.xpose.msra.mxu0 0.0
    %1452 = vmatprep.subr.mxu0 0.0
    %1453 = vmatpush1.xpose.msra.mxu0 0.0
    %1454 = vmatprep.subr.mxu0 0.0
    %1455 = vmatpush1.xpose.msra.mxu0 0.0
    %1456 = vmatprep.subr.mxu0 0.0
    %1457 = vmatpush1.xpose.msra.mxu0 0.0
    %1458 = vmatprep.subr.mxu0 0.0
    %1459 = vmatpush1.xpose.msra.mxu0 0.0
    %1460 = vmatprep.subr.mxu0 0.0
    %1461 = vmatpush1.xpose.msra.mxu0 0.0
    %1462 = vmatprep.subr.mxu0 0.0
    %1463 = vmatpush1.xpose.msra.mxu0 0.0
    %1464 = vmatprep.subr.mxu0 0.0
    %1465 = vmatpush1.xpose.msra.mxu0 0.0
    %1466 = vmatprep.subr.mxu0 0.0
    %1467 = vmatpush1.xpose.msra.mxu0 0.0
    %1468 = vmatprep.subr.mxu0 0.0
    %1469 = vmatpush1.xpose.msra.mxu0 0.0
    %1470 = vmatprep.subr.mxu0 0.0
    %1471 = vmatpush1.xpose.msra.mxu0 0.0
    %1472 = vmatprep.subr.mxu0 0.0
    %1473 = vmatpush1.xpose.msra.mxu0 0.0
    %1474 = vmatprep.subr.mxu0 0.0
    %1475 = vmatpush1.xpose.msra.mxu0 0.0
    %1476 = vmatprep.subr.mxu0 0.0
    %1477 = vmatpush1.xpose.msra.mxu0 0.0
    %1478 = vmatprep.subr.mxu0 0.0
    %1479 = vmatpush1.xpose.msra.mxu0 0.0
    %1480 = vmatprep.subr.mxu0 0.0
    %1481 = vmatpush1.xpose.msra.mxu0 0.0
    %1482 = vmatprep.subr.mxu0 0.0
    %1483 = vmatpush1.xpose.msra.mxu0 0.0
    %1484 = vmatprep.subr.mxu0 0.0
    %1485 = vmatpush1.xpose.msra.mxu0 0.0
    %1486 = vmatprep.subr.mxu0 0.0
    %1487 = vmatpush1.xpose.msra.mxu0 0.0
    %1488 = vmatprep.subr.mxu0 0.0
    %1489 = vmatpush1.xpose.msra.mxu0 0.0
    %1490 = vmatprep.mubr.f32.mxu0 0.0
    %1491 = vmatmul.mubr.f32.gmra.mrb[0].mxu0 %v1422
    %v1492 = vpop.f32.mrb[0].mxu0
    %v1493 = vadd.f32 0.0, %v1492
    %v1494 = vpop.f32.mrb[0].mxu0
    %1495 = vdwg.mxu0
    %v1496 = vsel %vm397, %v1493, -inf
    %1497 = vmax.xlane.f32.xlu0 %v1496
    %v1498 = vpop.xlane.xlu0 %1497
    %v1499 = vsub.f32 %v1493, %v1498
    %v1500 = vmul.f32 %v1499, 1.442695
    %v1501 = vpow.pop %v1500
    %v1502 = vsel %vm397, %v1501, 0.0
    %1503 = vadd.xlane.f32.xlu0 %v1502
    %v1504 = vpop.xlane.xlu0 %1503
    %v1505 = vrcp.pop %v1504
    %v1506 = vmul.f32 %v1501, %v1505
    %1507 = vrot.lane.b32.xlu0 %v1245, 56
    %v1508 = vpop.permute.xlu0 %1507
    %v1511 = vsel %vm397, %v1506, 0
    %1513 = vmatprep.subr.mxu0 0.0
    %1514 = vmatpush1.msra.mxu0 %v1508
    %1515 = vmatprep.subr.mxu0 0.0
    %1516 = vmatpush1.msra.mxu0 0.0
    %1517 = vmatprep.subr.mxu0 0.0
    %1518 = vmatpush1.msra.mxu0 0.0
    %1519 = vmatprep.subr.mxu0 0.0
    %1520 = vmatpush1.msra.mxu0 0.0
    %1521 = vmatprep.subr.mxu0 0.0
    %1522 = vmatpush1.msra.mxu0 0.0
    %1523 = vmatprep.subr.mxu0 0.0
    %1524 = vmatpush1.msra.mxu0 0.0
    %1525 = vmatprep.subr.mxu0 0.0
    %1526 = vmatpush1.msra.mxu0 0.0
    %1527 = vmatprep.subr.mxu0 0.0
    %1528 = vmatpush1.msra.mxu0 0.0
    %1529 = vmatprep.subr.mxu0 0.0
    %1530 = vmatpush1.msra.mxu0 0.0
    %1531 = vmatprep.subr.mxu0 0.0
    %1532 = vmatpush1.msra.mxu0 0.0
    %1533 = vmatprep.subr.mxu0 0.0
    %1534 = vmatpush1.msra.mxu0 0.0
    %1535 = vmatprep.subr.mxu0 0.0
    %1536 = vmatpush1.msra.mxu0 0.0
    %1537 = vmatprep.subr.mxu0 0.0
    %1538 = vmatpush1.msra.mxu0 0.0
    %1539 = vmatprep.subr.mxu0 0.0
    %1540 = vmatpush1.msra.mxu0 0.0
    %1541 = vmatprep.subr.mxu0 0.0
    %1542 = vmatpush1.msra.mxu0 0.0
    %1543 = vmatprep.subr.mxu0 0.0
    %1544 = vmatpush1.msra.mxu0 0.0
    %1545 = vmatprep.subr.mxu0 0.0
    %1546 = vmatpush1.msra.mxu0 0.0
    %1547 = vmatprep.subr.mxu0 0.0
    %1548 = vmatpush1.msra.mxu0 0.0
    %1549 = vmatprep.subr.mxu0 0.0
    %1550 = vmatpush1.msra.mxu0 0.0
    %1551 = vmatprep.subr.mxu0 0.0
    %1552 = vmatpush1.msra.mxu0 0.0
    %1553 = vmatprep.subr.mxu0 0.0
    %1554 = vmatpush1.msra.mxu0 0.0
    %1555 = vmatprep.subr.mxu0 0.0
    %1556 = vmatpush1.msra.mxu0 0.0
    %1557 = vmatprep.subr.mxu0 0.0
    %1558 = vmatpush1.msra.mxu0 0.0
    %1559 = vmatprep.subr.mxu0 0.0
    %1560 = vmatpush1.msra.mxu0 0.0
    %1561 = vmatprep.subr.mxu0 0.0
    %1562 = vmatpush1.msra.mxu0 0.0
    %1563 = vmatprep.subr.mxu0 0.0
    %1564 = vmatpush1.msra.mxu0 0.0
    %1565 = vmatprep.subr.mxu0 0.0
    %1566 = vmatpush1.msra.mxu0 0.0
    %1567 = vmatprep.subr.mxu0 0.0
    %1568 = vmatpush1.msra.mxu0 0.0
    %1569 = vmatprep.subr.mxu0 0.0
    %1570 = vmatpush1.msra.mxu0 0.0
    %1571 = vmatprep.subr.mxu0 0.0
    %1572 = vmatpush1.msra.mxu0 0.0
    %1573 = vmatprep.subr.mxu0 0.0
    %1574 = vmatpush1.msra.mxu0 0.0
    %1575 = vmatprep.subr.mxu0 0.0
    %1576 = vmatpush1.msra.mxu0 0.0
    %1577 = vmatprep.mubr.f32.mxu0 0.0
    %1578 = vmatmul.mubr.f32.gmra.mrb[0].mxu0 %v1511
    %v1579 = vpop.f32.mrb[0].mxu0
    %v1580 = vadd.f32 0.0, %v1579
    %v1581 = vpop.f32.mrb[0].mxu0
    %1582 = vdwg.mxu0
    %1583 = vrot.lane.b32.xlu0 %v1245, 112
    %v1584 = vpop.permute.xlu0 %1583
    %1585 = vrot.lane.b32.xlu0 %v1245, 80
    %v1586 = vpop.permute.xlu0 %1585
    %v1587 = vsel %vm397, %v1584, 0
    %v1589 = vsel %vm397, %v1586, 0
    %1591 = vmatprep.subr.mxu0 0.0
    %1592 = vmatpush1.xpose.msra.mxu0 %v1589
    %1593 = vmatprep.subr.mxu0 0.0
    %1594 = vmatpush1.xpose.msra.mxu0 0.0
    %1595 = vmatprep.subr.mxu0 0.0
    %1596 = vmatpush1.xpose.msra.mxu0 0.0
    %1597 = vmatprep.subr.mxu0 0.0
    %1598 = vmatpush1.xpose.msra.mxu0 0.0
    %1599 = vmatprep.subr.mxu0 0.0
    %1600 = vmatpush1.xpose.msra.mxu0 0.0
    %1601 = vmatprep.subr.mxu0 0.0
    %1602 = vmatpush1.xpose.msra.mxu0 0.0
    %1603 = vmatprep.subr.mxu0 0.0
    %1604 = vmatpush1.xpose.msra.mxu0 0.0
    %1605 = vmatprep.subr.mxu0 0.0
    %1606 = vmatpush1.xpose.msra.mxu0 0.0
    %1607 = vmatprep.subr.mxu0 0.0
    %1608 = vmatpush1.xpose.msra.mxu0 0.0
    %1609 = vmatprep.subr.mxu0 0.0
    %1610 = vmatpush1.xpose.msra.mxu0 0.0
    %1611 = vmatprep.subr.mxu0 0.0
    %1612 = vmatpush1.xpose.msra.mxu0 0.0
    %1613 = vmatprep.subr.mxu0 0.0
    %1614 = vmatpush1.xpose.msra.mxu0 0.0
    %1615 = vmatprep.subr.mxu0 0.0
    %1616 = vmatpush1.xpose.msra.mxu0 0.0
    %1617 = vmatprep.subr.mxu0 0.0
    %1618 = vmatpush1.xpose.msra.mxu0 0.0
    %1619 = vmatprep.subr.mxu0 0.0
    %1620 = vmatpush1.xpose.msra.mxu0 0.0
    %1621 = vmatprep.subr.mxu0 0.0
    %1622 = vmatpush1.xpose.msra.mxu0 0.0
    %1623 = vmatprep.subr.mxu0 0.0
    %1624 = vmatpush1.xpose.msra.mxu0 0.0
    %1625 = vmatprep.subr.mxu0 0.0
    %1626 = vmatpush1.xpose.msra.mxu0 0.0
    %1627 = vmatprep.subr.mxu0 0.0
    %1628 = vmatpush1.xpose.msra.mxu0 0.0
    %1629 = vmatprep.subr.mxu0 0.0
    %1630 = vmatpush1.xpose.msra.mxu0 0.0
    %1631 = vmatprep.subr.mxu0 0.0
    %1632 = vmatpush1.xpose.msra.mxu0 0.0
    %1633 = vmatprep.subr.mxu0 0.0
    %1634 = vmatpush1.xpose.msra.mxu0 0.0
    %1635 = vmatprep.subr.mxu0 0.0
    %1636 = vmatpush1.xpose.msra.mxu0 0.0
    %1637 = vmatprep.subr.mxu0 0.0
    %1638 = vmatpush1.xpose.msra.mxu0 0.0
    %1639 = vmatprep.subr.mxu0 0.0
    %1640 = vmatpush1.xpose.msra.mxu0 0.0
    %1641 = vmatprep.subr.mxu0 0.0
    %1642 = vmatpush1.xpose.msra.mxu0 0.0
    %1643 = vmatprep.subr.mxu0 0.0
    %1644 = vmatpush1.xpose.msra.mxu0 0.0
    %1645 = vmatprep.subr.mxu0 0.0
    %1646 = vmatpush1.xpose.msra.mxu0 0.0
    %1647 = vmatprep.subr.mxu0 0.0
    %1648 = vmatpush1.xpose.msra.mxu0 0.0
    %1649 = vmatprep.subr.mxu0 0.0
    %1650 = vmatpush1.xpose.msra.mxu0 0.0
    %1651 = vmatprep.subr.mxu0 0.0
    %1652 = vmatpush1.xpose.msra.mxu0 0.0
    %1653 = vmatprep.subr.mxu0 0.0
    %1654 = vmatpush1.xpose.msra.mxu0 0.0
    %1655 = vmatprep.mubr.f32.mxu0 0.0
    %1656 = vmatmul.mubr.f32.gmra.mrb[0].mxu0 %v1587
    %v1657 = vpop.f32.mrb[0].mxu0
    %v1658 = vadd.f32 0.0, %v1657
    %v1659 = vpop.f32.mrb[0].mxu0
    %1660 = vdwg.mxu0
    %v1661 = vsel %vm397, %v1658, -inf
    %1662 = vmax.xlane.f32.xlu0 %v1661
    %v1663 = vpop.xlane.xlu0 %1662
    %v1664 = vsub.f32 %v1658, %v1663
    %v1665 = vmul.f32 %v1664, 1.442695
    %v1666 = vpow.pop %v1665
    %v1667 = vsel %vm397, %v1666, 0.0
    %1668 = vadd.xlane.f32.xlu0 %v1667
    %v1669 = vpop.xlane.xlu0 %1668
    %v1670 = vrcp.pop %v1669
    %v1671 = vmul.f32 %v1666, %v1670
    %1672 = vrot.lane.b32.xlu0 %v1245, 48
    %v1673 = vpop.permute.xlu0 %1672
    %v1676 = vsel %vm397, %v1671, 0
    %1678 = vmatprep.subr.mxu0 0.0
    %1679 = vmatpush1.msra.mxu0 %v1673
    %1680 = vmatprep.subr.mxu0 0.0
    %1681 = vmatpush1.msra.mxu0 0.0
    %1682 = vmatprep.subr.mxu0 0.0
    %1683 = vmatpush1.msra.mxu0 0.0
    %1684 = vmatprep.subr.mxu0 0.0
    %1685 = vmatpush1.msra.mxu0 0.0
    %1686 = vmatprep.subr.mxu0 0.0
    %1687 = vmatpush1.msra.mxu0 0.0
    %1688 = vmatprep.subr.mxu0 0.0
    %1689 = vmatpush1.msra.mxu0 0.0
    %1690 = vmatprep.subr.mxu0 0.0
    %1691 = vmatpush1.msra.mxu0 0.0
    %1692 = vmatprep.subr.mxu0 0.0
    %1693 = vmatpush1.msra.mxu0 0.0
    %1694 = vmatprep.subr.mxu0 0.0
    %1695 = vmatpush1.msra.mxu0 0.0
    %1696 = vmatprep.subr.mxu0 0.0
    %1697 = vmatpush1.msra.mxu0 0.0
    %1698 = vmatprep.subr.mxu0 0.0
    %1699 = vmatpush1.msra.mxu0 0.0
    %1700 = vmatprep.subr.mxu0 0.0
    %1701 = vmatpush1.msra.mxu0 0.0
    %1702 = vmatprep.subr.mxu0 0.0
    %1703 = vmatpush1.msra.mxu0 0.0
    %1704 = vmatprep.subr.mxu0 0.0
    %1705 = vmatpush1.msra.mxu0 0.0
    %1706 = vmatprep.subr.mxu0 0.0
    %1707 = vmatpush1.msra.mxu0 0.0
    %1708 = vmatprep.subr.mxu0 0.0
    %1709 = vmatpush1.msra.mxu0 0.0
    %1710 = vmatprep.subr.mxu0 0.0
    %1711 = vmatpush1.msra.mxu0 0.0
    %1712 = vmatprep.subr.mxu0 0.0
    %1713 = vmatpush1.msra.mxu0 0.0
    %1714 = vmatprep.subr.mxu0 0.0
    %1715 = vmatpush1.msra.mxu0 0.0
    %1716 = vmatprep.subr.mxu0 0.0
    %1717 = vmatpush1.msra.mxu0 0.0
    %1718 = vmatprep.subr.mxu0 0.0
    %1719 = vmatpush1.msra.mxu0 0.0
    %1720 = vmatprep.subr.mxu0 0.0
    %1721 = vmatpush1.msra.mxu0 0.0
    %1722 = vmatprep.subr.mxu0 0.0
    %1723 = vmatpush1.msra.mxu0 0.0
    %1724 = vmatprep.subr.mxu0 0.0
    %1725 = vmatpush1.msra.mxu0 0.0
    %1726 = vmatprep.subr.mxu0 0.0
    %1727 = vmatpush1.msra.mxu0 0.0
    %1728 = vmatprep.subr.mxu0 0.0
    %1729 = vmatpush1.msra.mxu0 0.0
    %1730 = vmatprep.subr.mxu0 0.0
    %1731 = vmatpush1.msra.mxu0 0.0
    %1732 = vmatprep.subr.mxu0 0.0
    %1733 = vmatpush1.msra.mxu0 0.0
    %1734 = vmatprep.subr.mxu0 0.0
    %1735 = vmatpush1.msra.mxu0 0.0
    %1736 = vmatprep.subr.mxu0 0.0
    %1737 = vmatpush1.msra.mxu0 0.0
    %1738 = vmatprep.subr.mxu0 0.0
    %1739 = vmatpush1.msra.mxu0 0.0
    %1740 = vmatprep.subr.mxu0 0.0
    %1741 = vmatpush1.msra.mxu0 0.0
    %1742 = vmatprep.mubr.f32.mxu0 0.0
    %1743 = vmatmul.mubr.f32.gmra.mrb[0].mxu0 %v1676
    %v1744 = vpop.f32.mrb[0].mxu0
    %v1745 = vadd.f32 0.0, %v1744
    %v1746 = vpop.f32.mrb[0].mxu0
    %1747 = vdwg.mxu0
    %1748 = vrot.lane.b32.xlu0 %v1245, 104
    %v1749 = vpop.permute.xlu0 %1748
    %1750 = vrot.lane.b32.xlu0 %v1245, 72
    %v1751 = vpop.permute.xlu0 %1750
    %v1752 = vsel %vm397, %v1749, 0
    %v1754 = vsel %vm397, %v1751, 0
    %1756 = vmatprep.subr.mxu0 0.0
    %1757 = vmatpush1.xpose.msra.mxu0 %v1754
    %1758 = vmatprep.subr.mxu0 0.0
    %1759 = vmatpush1.xpose.msra.mxu0 0.0
    %1760 = vmatprep.subr.mxu0 0.0
    %1761 = vmatpush1.xpose.msra.mxu0 0.0
    %1762 = vmatprep.subr.mxu0 0.0
    %1763 = vmatpush1.xpose.msra.mxu0 0.0
    %1764 = vmatprep.subr.mxu0 0.0
    %1765 = vmatpush1.xpose.msra.mxu0 0.0
    %1766 = vmatprep.subr.mxu0 0.0
    %1767 = vmatpush1.xpose.msra.mxu0 0.0
    %1768 = vmatprep.subr.mxu0 0.0
    %1769 = vmatpush1.xpose.msra.mxu0 0.0
    %1770 = vmatprep.subr.mxu0 0.0
    %1771 = vmatpush1.xpose.msra.mxu0 0.0
    %1772 = vmatprep.subr.mxu0 0.0
    %1773 = vmatpush1.xpose.msra.mxu0 0.0
    %1774 = vmatprep.subr.mxu0 0.0
    %1775 = vmatpush1.xpose.msra.mxu0 0.0
    %1776 = vmatprep.subr.mxu0 0.0
    %1777 = vmatpush1.xpose.msra.mxu0 0.0
    %1778 = vmatprep.subr.mxu0 0.0
    %1779 = vmatpush1.xpose.msra.mxu0 0.0
    %1780 = vmatprep.subr.mxu0 0.0
    %1781 = vmatpush1.xpose.msra.mxu0 0.0
    %1782 = vmatprep.subr.mxu0 0.0
    %1783 = vmatpush1.xpose.msra.mxu0 0.0
    %1784 = vmatprep.subr.mxu0 0.0
    %1785 = vmatpush1.xpose.msra.mxu0 0.0
    %1786 = vmatprep.subr.mxu0 0.0
    %1787 = vmatpush1.xpose.msra.mxu0 0.0
    %1788 = vmatprep.subr.mxu0 0.0
    %1789 = vmatpush1.xpose.msra.mxu0 0.0
    %1790 = vmatprep.subr.mxu0 0.0
    %1791 = vmatpush1.xpose.msra.mxu0 0.0
    %1792 = vmatprep.subr.mxu0 0.0
    %1793 = vmatpush1.xpose.msra.mxu0 0.0
    %1794 = vmatprep.subr.mxu0 0.0
    %1795 = vmatpush1.xpose.msra.mxu0 0.0
    %1796 = vmatprep.subr.mxu0 0.0
    %1797 = vmatpush1.xpose.msra.mxu0 0.0
    %1798 = vmatprep.subr.mxu0 0.0
    %1799 = vmatpush1.xpose.msra.mxu0 0.0
    %1800 = vmatprep.subr.mxu0 0.0
    %1801 = vmatpush1.xpose.msra.mxu0 0.0
    %1802 = vmatprep.subr.mxu0 0.0
    %1803 = vmatpush1.xpose.msra.mxu0 0.0
    %1804 = vmatprep.subr.mxu0 0.0
    %1805 = vmatpush1.xpose.msra.mxu0 0.0
    %1806 = vmatprep.subr.mxu0 0.0
    %1807 = vmatpush1.xpose.msra.mxu0 0.0
    %1808 = vmatprep.subr.mxu0 0.0
    %1809 = vmatpush1.xpose.msra.mxu0 0.0
    %1810 = vmatprep.subr.mxu0 0.0
    %1811 = vmatpush1.xpose.msra.mxu0 0.0
    %1812 = vmatprep.subr.mxu0 0.0
    %1813 = vmatpush1.xpose.msra.mxu0 0.0
    %1814 = vmatprep.subr.mxu0 0.0
    %1815 = vmatpush1.xpose.msra.mxu0 0.0
    %1816 = vmatprep.subr.mxu0 0.0
    %1817 = vmatpush1.xpose.msra.mxu0 0.0
    %1818 = vmatprep.subr.mxu0 0.0
    %1819 = vmatpush1.xpose.msra.mxu0 0.0
    %1820 = vmatprep.mubr.f32.mxu0 0.0
    %1821 = vmatmul.mubr.f32.gmra.mrb[0].mxu0 %v1752
    %v1822 = vpop.f32.mrb[0].mxu0
    %v1823 = vadd.f32 0.0, %v1822
    %v1824 = vpop.f32.mrb[0].mxu0
    %1825 = vdwg.mxu0
    %v1826 = vsel %vm397, %v1823, -inf
    %1827 = vmax.xlane.f32.xlu0 %v1826
    %v1828 = vpop.xlane.xlu0 %1827
    %v1829 = vsub.f32 %v1823, %v1828
    %v1830 = vmul.f32 %v1829, 1.442695
    %v1831 = vpow.pop %v1830
    %v1832 = vsel %vm397, %v1831, 0.0
    %1833 = vadd.xlane.f32.xlu0 %v1832
    %v1834 = vpop.xlane.xlu0 %1833
    %v1835 = vrcp.pop %v1834
    %v1836 = vmul.f32 %v1831, %v1835
    %1837 = vrot.lane.b32.xlu0 %v1245, 40
    %v1838 = vpop.permute.xlu0 %1837
    %v1841 = vsel %vm397, %v1836, 0
    %1843 = vmatprep.subr.mxu0 0.0
    %1844 = vmatpush1.msra.mxu0 %v1838
    %1845 = vmatprep.subr.mxu0 0.0
    %1846 = vmatpush1.msra.mxu0 0.0
    %1847 = vmatprep.subr.mxu0 0.0
    %1848 = vmatpush1.msra.mxu0 0.0
    %1849 = vmatprep.subr.mxu0 0.0
    %1850 = vmatpush1.msra.mxu0 0.0
    %1851 = vmatprep.subr.mxu0 0.0
    %1852 = vmatpush1.msra.mxu0 0.0
    %1853 = vmatprep.subr.mxu0 0.0
    %1854 = vmatpush1.msra.mxu0 0.0
    %1855 = vmatprep.subr.mxu0 0.0
    %1856 = vmatpush1.msra.mxu0 0.0
    %1857 = vmatprep.subr.mxu0 0.0
    %1858 = vmatpush1.msra.mxu0 0.0
    %1859 = vmatprep.subr.mxu0 0.0
    %1860 = vmatpush1.msra.mxu0 0.0
    %1861 = vmatprep.subr.mxu0 0.0
    %1862 = vmatpush1.msra.mxu0 0.0
    %1863 = vmatprep.subr.mxu0 0.0
    %1864 = vmatpush1.msra.mxu0 0.0
    %1865 = vmatprep.subr.mxu0 0.0
    %1866 = vmatpush1.msra.mxu0 0.0
    %1867 = vmatprep.subr.mxu0 0.0
    %1868 = vmatpush1.msra.mxu0 0.0
    %1869 = vmatprep.subr.mxu0 0.0
    %1870 = vmatpush1.msra.mxu0 0.0
    %1871 = vmatprep.subr.mxu0 0.0
    %1872 = vmatpush1.msra.mxu0 0.0
    %1873 = vmatprep.subr.mxu0 0.0
    %1874 = vmatpush1.msra.mxu0 0.0
    %1875 = vmatprep.subr.mxu0 0.0
    %1876 = vmatpush1.msra.mxu0 0.0
    %1877 = vmatprep.subr.mxu0 0.0
    %1878 = vmatpush1.msra.mxu0 0.0
    %1879 = vmatprep.subr.mxu0 0.0
    %1880 = vmatpush1.msra.mxu0 0.0
    %1881 = vmatprep.subr.mxu0 0.0
    %1882 = vmatpush1.msra.mxu0 0.0
    %1883 = vmatprep.subr.mxu0 0.0
    %1884 = vmatpush1.msra.mxu0 0.0
    %1885 = vmatprep.subr.mxu0 0.0
    %1886 = vmatpush1.msra.mxu0 0.0
    %1887 = vmatprep.subr.mxu0 0.0
    %1888 = vmatpush1.msra.mxu0 0.0
    %1889 = vmatprep.subr.mxu0 0.0
    %1890 = vmatpush1.msra.mxu0 0.0
    %1891 = vmatprep.subr.mxu0 0.0
    %1892 = vmatpush1.msra.mxu0 0.0
    %1893 = vmatprep.subr.mxu0 0.0
    %1894 = vmatpush1.msra.mxu0 0.0
    %1895 = vmatprep.subr.mxu0 0.0
    %1896 = vmatpush1.msra.mxu0 0.0
    %1897 = vmatprep.subr.mxu0 0.0
    %1898 = vmatpush1.msra.mxu0 0.0
    %1899 = vmatprep.subr.mxu0 0.0
    %1900 = vmatpush1.msra.mxu0 0.0
    %1901 = vmatprep.subr.mxu0 0.0
    %1902 = vmatpush1.msra.mxu0 0.0
    %1903 = vmatprep.subr.mxu0 0.0
    %1904 = vmatpush1.msra.mxu0 0.0
    %1905 = vmatprep.subr.mxu0 0.0
    %1906 = vmatpush1.msra.mxu0 0.0
    %1907 = vmatprep.mubr.f32.mxu0 0.0
    %1908 = vmatmul.mubr.f32.gmra.mrb[0].mxu0 %v1841
    %v1909 = vpop.f32.mrb[0].mxu0
    %v1910 = vadd.f32 0.0, %v1909
    %v1911 = vpop.f32.mrb[0].mxu0
    %1912 = vdwg.mxu0
    %1914 = vrot.lane.b32.xlu0 %v1580, 8
    %v1915 = vpop.permute.xlu0 %1914
    %1918 = vrot.lane.b32.xlu0 %v1745, 16
    %v1919 = vpop.permute.xlu0 %1918
    %1922 = vrot.lane.b32.xlu0 %v1910, 24
    %v1923 = vpop.permute.xlu0 %1922
    %v1925 = vsel %vm397, %v1415, %v1915
    %v1926 = vsel %vm1077, %v1925, %v1919
    %v1927 = vsel %vm1079, %v1926, %v1923
    %1929 = vrot.lane.b32.xlu0 %v1253, 32
    %v1930 = vpop.permute.xlu0 %1929
    %v1932 = vmul.f32 %v1927, %v1930
    %1937 = vrot.lane.b32.xlu0 %v46, 96
    %v1938 = vpop.permute.xlu0 %1937
    %1939 = vrot.lane.b32.xlu0 %v47, 96
    %v1940 = vpop.permute.xlu0 %1939
    %1941 = vrot.lane.b32.xlu0 %v48, 96
    %v1942 = vpop.permute.xlu0 %1941
    %1943 = vrot.lane.b32.xlu0 %v49, 96
    %v1944 = vpop.permute.xlu0 %1943
    %v1950 = vsel %vm298, %v1932, 0
    %1952 = vmatprep.subr.mxu0 0.0
    %1953 = vmatpush1.msra.mxu0 %v1938
    %1954 = vmatprep.subr.mxu0 0.0
    %1955 = vmatpush1.msra.mxu0 %v1940
    %1956 = vmatprep.subr.mxu0 0.0
    %1957 = vmatpush1.msra.mxu0 %v1942
    %1958 = vmatprep.subr.mxu0 0.0
    %1959 = vmatpush1.msra.mxu0 %v1944
    %1960 = vmatprep.subr.mxu0 0.0
    %1961 = vmatpush1.msra.mxu0 0.0
    %1962 = vmatprep.subr.mxu0 0.0
    %1963 = vmatpush1.msra.mxu0 0.0
    %1964 = vmatprep.subr.mxu0 0.0
    %1965 = vmatpush1.msra.mxu0 0.0
    %1966 = vmatprep.subr.mxu0 0.0
    %1967 = vmatpush1.msra.mxu0 0.0
    %1968 = vmatprep.subr.mxu0 0.0
    %1969 = vmatpush1.msra.mxu0 0.0
    %1970 = vmatprep.subr.mxu0 0.0
    %1971 = vmatpush1.msra.mxu0 0.0
    %1972 = vmatprep.subr.mxu0 0.0
    %1973 = vmatpush1.msra.mxu0 0.0
    %1974 = vmatprep.subr.mxu0 0.0
    %1975 = vmatpush1.msra.mxu0 0.0
    %1976 = vmatprep.subr.mxu0 0.0
    %1977 = vmatpush1.msra.mxu0 0.0
    %1978 = vmatprep.subr.mxu0 0.0
    %1979 = vmatpush1.msra.mxu0 0.0
    %1980 = vmatprep.subr.mxu0 0.0
    %1981 = vmatpush1.msra.mxu0 0.0
    %1982 = vmatprep.subr.mxu0 0.0
    %1983 = vmatpush1.msra.mxu0 0.0
    %1984 = vmatprep.subr.mxu0 0.0
    %1985 = vmatpush1.msra.mxu0 0.0
    %1986 = vmatprep.subr.mxu0 0.0
    %1987 = vmatpush1.msra.mxu0 0.0
    %1988 = vmatprep.subr.mxu0 0.0
    %1989 = vmatpush1.msra.mxu0 0.0
    %1990 = vmatprep.subr.mxu0 0.0
    %1991 = vmatpush1.msra.mxu0 0.0
    %1992 = vmatprep.subr.mxu0 0.0
    %1993 = vmatpush1.msra.mxu0 0.0
    %1994 = vmatprep.subr.mxu0 0.0
    %1995 = vmatpush1.msra.mxu0 0.0
    %1996 = vmatprep.subr.mxu0 0.0
    %1997 = vmatpush1.msra.mxu0 0.0
    %1998 = vmatprep.subr.mxu0 0.0
    %1999 = vmatpush1.msra.mxu0 0.0
    %2000 = vmatprep.subr.mxu0 0.0
    %2001 = vmatpush1.msra.mxu0 0.0
    %2002 = vmatprep.subr.mxu0 0.0
    %2003 = vmatpush1.msra.mxu0 0.0
    %2004 = vmatprep.subr.mxu0 0.0
    %2005 = vmatpush1.msra.mxu0 0.0
    %2006 = vmatprep.subr.mxu0 0.0
    %2007 = vmatpush1.msra.mxu0 0.0
    %2008 = vmatprep.subr.mxu0 0.0
    %2009 = vmatpush1.msra.mxu0 0.0
    %2010 = vmatprep.subr.mxu0 0.0
    %2011 = vmatpush1.msra.mxu0 0.0
    %2012 = vmatprep.subr.mxu0 0.0
    %2013 = vmatpush1.msra.mxu0 0.0
    %2014 = vmatprep.subr.mxu0 0.0
    %2015 = vmatpush1.msra.mxu0 0.0
    %2016 = vmatprep.mubr.f32.mxu0 0.0
    %2017 = vmatmul.mubr.f32.gmra.mrb[0].mxu0 %v1950
    %v2018 = vpop.f32.mrb[0].mxu0
    %v2019 = vadd.f32 %v29, %v2018
    %v2020 = vpop.f32.mrb[0].mxu0
    %2021 = vdwg.mxu0
    %v2022 = vadd.f32 %v1159, %v2019
    %v2023 = vsel %vm298, %v2022, 0.0
    %2024 = vadd.xlane.f32.xlu0 %v2023
    %v2025 = vpop.xlane.xlu0 %2024
    %v2026 = vmul.f32 %v2025, %v302
    %v2027 = vsub.f32 %v2022, %v2026
    %v2028 = vmul.f32 %v2027, %v2027
    %v2029 = vsel %vm298, %v2028, 0.0
    %2030 = vadd.xlane.f32.xlu0 %v2029
    %v2031 = vpop.xlane.xlu0 %2030
    %v2032 = vmul.f32 %v2031, %v302
    %v2033 = vadd.f32 %v2032, 1e-05
    %v2034 = vrsqrt.pop %v2033
    %v2035 = vmul.f32 %v2027, %v2034
    %v2036 = vmul.f32 %v2035, %v30
    %v2037 = vadd.f32 %v2036, %v31
    %v2039 = vsel %vm298, %v2037, 0
    %2041 = vmatprep.subr.mxu0 0.0
    %2042 = vmatpush1.msra.mxu0 %v42
    %2043 = vmatprep.subr.mxu0 0.0
    %2044 = vmatpush1.msra.mxu0 %v43
    %2045 = vmatprep.subr.mxu0 0.0
    %2046 = vmatpush1.msra.mxu0 %v44
    %2047 = vmatprep.subr.mxu0 0.0
    %2048 = vmatpush1.msra.mxu0 %v45
    %2049 = vmatprep.subr.mxu0 0.0
    %2050 = vmatpush1.msra.mxu0 0.0
    %2051 = vmatprep.subr.mxu0 0.0
    %2052 = vmatpush1.msra.mxu0 0.0
    %2053 = vmatprep.subr.mxu0 0.0
    %2054 = vmatpush1.msra.mxu0 0.0
    %2055 = vmatprep.subr.mxu0 0.0
    %2056 = vmatpush1.msra.mxu0 0.0
    %2057 = vmatprep.subr.mxu0 0.0
    %2058 = vmatpush1.msra.mxu0 0.0
    %2059 = vmatprep.subr.mxu0 0.0
    %2060 = vmatpush1.msra.mxu0 0.0
    %2061 = vmatprep.subr.mxu0 0.0
    %2062 = vmatpush1.msra.mxu0 0.0
    %2063 = vmatprep.subr.mxu0 0.0
    %2064 = vmatpush1.msra.mxu0 0.0
    %2065 = vmatprep.subr.mxu0 0.0
    %2066 = vmatpush1.msra.mxu0 0.0
    %2067 = vmatprep.subr.mxu0 0.0
    %2068 = vmatpush1.msra.mxu0 0.0
    %2069 = vmatprep.subr.mxu0 0.0
    %2070 = vmatpush1.msra.mxu0 0.0
    %2071 = vmatprep.subr.mxu0 0.0
    %2072 = vmatpush1.msra.mxu0 0.0
    %2073 = vmatprep.subr.mxu0 0.0
    %2074 = vmatpush1.msra.mxu0 0.0
    %2075 = vmatprep.subr.mxu0 0.0
    %2076 = vmatpush1.msra.mxu0 0.0
    %2077 = vmatprep.subr.mxu0 0.0
    %2078 = vmatpush1.msra.mxu0 0.0
    %2079 = vmatprep.subr.mxu0 0.0
    %2080 = vmatpush1.msra.mxu0 0.0
    %2081 = vmatprep.subr.mxu0 0.0
    %2082 = vmatpush1.msra.mxu0 0.0
    %2083 = vmatprep.subr.mxu0 0.0
    %2084 = vmatpush1.msra.mxu0 0.0
    %2085 = vmatprep.subr.mxu0 0.0
    %2086 = vmatpush1.msra.mxu0 0.0
    %2087 = vmatprep.subr.mxu0 0.0
    %2088 = vmatpush1.msra.mxu0 0.0
    %2089 = vmatprep.subr.mxu0 0.0
    %2090 = vmatpush1.msra.mxu0 0.0
    %2091 = vmatprep.subr.mxu0 0.0
    %2092 = vmatpush1.msra.mxu0 0.0
    %2093 = vmatprep.subr.mxu0 0.0
    %2094 = vmatpush1.msra.mxu0 0.0
    %2095 = vmatprep.subr.mxu0 0.0
    %2096 = vmatpush1.msra.mxu0 0.0
    %2097 = vmatprep.subr.mxu0 0.0
    %2098 = vmatpush1.msra.mxu0 0.0
    %2099 = vmatprep.subr.mxu0 0.0
    %2100 = vmatpush1.msra.mxu0 0.0
    %2101 = vmatprep.subr.mxu0 0.0
    %2102 = vmatpush1.msra.mxu0 0.0
    %2103 = vmatprep.subr.mxu0 0.0
    %2104 = vmatpush1.msra.mxu0 0.0
    %2105 = vmatprep.mubr.f32.mxu0 0.0
    %2106 = vmatmul.mubr.f32.gmra.mrb[0].mxu0 %v2039
    %v2107 = vpop.f32.mrb[0].mxu0
    %v2108 = vadd.f32 %v32, %v2107
    %v2109 = vpop.f32.mrb[0].mxu0
    %2110 = vdwg.mxu0
    %v2111 = vmax.f32 %v2108, 0.0
    %2128 = vrot.lane.b32.xlu0 %v66, 96
    %v2129 = vpop.permute.xlu0 %2128
    %2130 = vrot.lane.b32.xlu0 %v67, 96
    %v2131 = vpop.permute.xlu0 %2130
    %2132 = vrot.lane.b32.xlu0 %v68, 96
    %v2133 = vpop.permute.xlu0 %2132
    %2134 = vrot.lane.b32.xlu0 %v69, 96
    %v2135 = vpop.permute.xlu0 %2134
    %2136 = vrot.lane.b32.xlu0 %v70, 96
    %v2137 = vpop.permute.xlu0 %2136
    %2138 = vrot.lane.b32.xlu0 %v71, 96
    %v2139 = vpop.permute.xlu0 %2138
    %2140 = vrot.lane.b32.xlu0 %v72, 96
    %v2141 = vpop.permute.xlu0 %2140
    %2142 = vrot.lane.b32.xlu0 %v73, 96
    %v2143 = vpop.permute.xlu0 %2142
    %2144 = vrot.lane.b32.xlu0 %v74, 96
    %v2145 = vpop.permute.xlu0 %2144
    %2146 = vrot.lane.b32.xlu0 %v75, 96
    %v2147 = vpop.permute.xlu0 %2146
    %2148 = vrot.lane.b32.xlu0 %v76, 96
    %v2149 = vpop.permute.xlu0 %2148
    %2150 = vrot.lane.b32.xlu0 %v77, 96
    %v2151 = vpop.permute.xlu0 %2150
    %2152 = vrot.lane.b32.xlu0 %v78, 96
    %v2153 = vpop.permute.xlu0 %2152
    %2154 = vrot.lane.b32.xlu0 %v79, 96
    %v2155 = vpop.permute.xlu0 %2154
    %2156 = vrot.lane.b32.xlu0 %v80, 96
    %v2157 = vpop.permute.xlu0 %2156
    %2158 = vrot.lane.b32.xlu0 %v81, 96
    %v2159 = vpop.permute.xlu0 %2158
    %2176 = vmatprep.subr.mxu0 0.0
    %2177 = vmatpush1.msra.mxu0 %v2129
    %2178 = vmatprep.subr.mxu0 0.0
    %2179 = vmatpush1.msra.mxu0 %v2131
    %2180 = vmatprep.subr.mxu0 0.0
    %2181 = vmatpush1.msra.mxu0 %v2133
    %2182 = vmatprep.subr.mxu0 0.0
    %2183 = vmatpush1.msra.mxu0 %v2135
    %2184 = vmatprep.subr.mxu0 0.0
    %2185 = vmatpush1.msra.mxu0 %v2137
    %2186 = vmatprep.subr.mxu0 0.0
    %2187 = vmatpush1.msra.mxu0 %v2139
    %2188 = vmatprep.subr.mxu0 0.0
    %2189 = vmatpush1.msra.mxu0 %v2141
    %2190 = vmatprep.subr.mxu0 0.0
    %2191 = vmatpush1.msra.mxu0 %v2143
    %2192 = vmatprep.subr.mxu0 0.0
    %2193 = vmatpush1.msra.mxu0 %v2145
    %2194 = vmatprep.subr.mxu0 0.0
    %2195 = vmatpush1.msra.mxu0 %v2147
    %2196 = vmatprep.subr.mxu0 0.0
    %2197 = vmatpush1.msra.mxu0 %v2149
    %2198 = vmatprep.subr.mxu0 0.0
    %2199 = vmatpush1.msra.mxu0 %v2151
    %2200 = vmatprep.subr.mxu0 0.0
    %2201 = vmatpush1.msra.mxu0 %v2153
    %2202 = vmatprep.subr.mxu0 0.0
    %2203 = vmatpush1.msra.mxu0 %v2155
    %2204 = vmatprep.subr.mxu0 0.0
    %2205 = vmatpush1.msra.mxu0 %v2157
    %2206 = vmatprep.subr.mxu0 0.0
    %2207 = vmatpush1.msra.mxu0 %v2159
    %2208 = vmatprep.subr.mxu0 0.0
    %2209 = vmatpush1.msra.mxu0 0.0
    %2210 = vmatprep.subr.mxu0 0.0
    %2211 = vmatpush1.msra.mxu0 0.0
    %2212 = vmatprep.subr.mxu0 0.0
    %2213 = vmatpush1.msra.mxu0 0.0
    %2214 = vmatprep.subr.mxu0 0.0
    %2215 = vmatpush1.msra.mxu0 0.0
    %2216 = vmatprep.subr.mxu0 0.0
    %2217 = vmatpush1.msra.mxu0 0.0
    %2218 = vmatprep.subr.mxu0 0.0
    %2219 = vmatpush1.msra.mxu0 0.0
    %2220 = vmatprep.subr.mxu0 0.0
    %2221 = vmatpush1.msra.mxu0 0.0
    %2222 = vmatprep.subr.mxu0 0.0
    %2223 = vmatpush1.msra.mxu0 0.0
    %2224 = vmatprep.subr.mxu0 0.0
    %2225 = vmatpush1.msra.mxu0 0.0
    %2226 = vmatprep.subr.mxu0 0.0
    %2227 = vmatpush1.msra.mxu0 0.0
    %2228 = vmatprep.subr.mxu0 0.0
    %2229 = vmatpush1.msra.mxu0 0.0
    %2230 = vmatprep.subr.mxu0 0.0
    %2231 = vmatpush1.msra.mxu0 0.0
    %2232 = vmatprep.subr.mxu0 0.0
    %2233 = vmatpush1.msra.mxu0 0.0
    %2234 = vmatprep.subr.mxu0 0.0
    %2235 = vmatpush1.msra.mxu0 0.0
    %2236 = vmatprep.subr.mxu0 0.0
    %2237 = vmatpush1.msra.mxu0 0.0
    %2238 = vmatprep.subr.mxu0 0.0
    %2239 = vmatpush1.msra.mxu0 0.0
    %2240 = vmatprep.mubr.f32.mxu0 0.0
    %2241 = vmatmul.mubr.f32.gmra.mrb[0].mxu0 %v2111
    %v2242 = vpop.f32.mrb[0].mxu0
    %v2243 = vadd.f32 0.0, %v2242
    %v2244 = vpop.f32.mrb[0].mxu0
    %2245 = vdwg.mxu0
    %v2246 = vadd.f32 %v2022, %v2243
    %v2247 = vadd.f32 %v2246, %v33
    %2248 = vst.msk [vmem:[#allocation2] sm:$0xff] %vm298, %v2247
    // Predicated region
    $region18: #{single_transformer_block.1} parent=1 // pred_check
      _
    $region19: #{single_transformer_block.1} parent=1 // pred_check_branch
      %2250 = sbr.rel (0) target = $region21
    $region20: #{single_transformer_block.1} parent=1 // pred_region
      %s2252 = ssub.s32 128, 128
      %2253 = vsyncadd [#allocation3], %s2252
      %s2255 = sshll.u32 [#allocation2], 4
      %s2256 = int_to_ptr.vmem [resolvable:$true] %s2255
      %2258 = dma.vmem_to_hbm [thread:$0]  %s2256, 128, %s4, [#allocation3]
    $region21: #{single_transformer_block.1} parent=1 // pred_fallthru
      _
    // Predicated region
    $region22: #{single_transformer_block.1} parent=1 // pred_check
      _
    $region23: #{single_transformer_block.1} parent=1 // pred_check_branch
      %2260 = sbr.rel (0) target = $region25
    $region24: #{single_transformer_block.1} parent=1 // pred_region
      %2261 = dma.done [#allocation3], 128
    $region25: #{single_transformer_block.1} parent=1 // pred_fallthru
      _
    %2262 = vsyncpa [#allocation3], 1

</llo_original>
